<compile_context>
chip_gen: v7x
topology: tpu7x:2x2x1
jax: 0.10.0
libtpu: 0.0.40
codegen_flags: <defaults>
</compile_context>

<pallas_src>
import math
from functools import partial

import jax
import jax.numpy as jnp
from jax import lax
from jax.experimental import pallas as pl
from jax.experimental.pallas import tpu as pltpu


def _attention_kernel(x_ref, wqkv_ref, bqkv_ref, o_ref, *, hidden_dim,
                      matmul_dtype):
    """One grid step: Bt independent [S, H] problems, fully fused."""
    Bt, S, H = x_ref.shape

    # [Bt, S, H] -> [Bt*S, H]: leading-dim merge (layout-preserving, free).
    x2 = x_ref[...].reshape(Bt * S, H).astype(matmul_dtype)
    w = wqkv_ref[...].astype(matmul_dtype)

    # Fused QKV projection: one MXU push [Bt*S, H] @ [H, 3H], f32 accumulate.
    qkv = jnp.dot(x2, w, preferred_element_type=jnp.float32) + bqkv_ref[...]

    # Static lane slices of the fused result, split back to per-problem blocks.
    q = qkv[:, 0 * H:1 * H].reshape(Bt, S, H)
    k = qkv[:, 1 * H:2 * H].reshape(Bt, S, H)
    v = qkv[:, 2 * H:3 * H].reshape(Bt, S, H)

    # scores[b] = q[b] @ k[b].T / sqrt(hidden_dim)
    # Contraction on the last dims (no explicit transpose through the XLU).
    scores = lax.dot_general(
        q.astype(matmul_dtype), k.astype(matmul_dtype),
        dimension_numbers=(((2,), (2,)), ((0,), (0,))),
        preferred_element_type=jnp.float32)
    scores = scores * (1.0 / math.sqrt(hidden_dim))

    # Numerically stable softmax over the last dim.
    m = jnp.max(scores, axis=-1, keepdims=True)
    e = jnp.exp(scores - m)
    denom = jnp.sum(e, axis=-1, keepdims=True)
    attn = e * pl.reciprocal(denom, approx=True)      # EUP vrcp (free slot)

    # Dropout(p=0.1): identity in inference mode.

    # Reference semantics: ELEMENTWISE product attn * v (requires S == H).
    o_ref[...] = (attn * v).astype(o_ref.dtype)


def attention_layer(x, wq, bq, wk, bk, wv, bv, *, block_b=8,
                    matmul_dtype=jnp.float32):
    """Inference-mode forward of AttentionLayer (Dropout == identity).

    x:  [B, S, H] or [S, H] (treated as B == 1); requires S == H because the
        reference forward multiplies the [S, S] attention map elementwise with
        the [S, H] value tensor.
    wq/wk/wv: [H, H] in PyTorch nn.Linear layout ([out, in]); bq/bk/bv: [H].
    matmul_dtype: set to jnp.bfloat16 on v6e/v7x for ~2x MXU throughput when
        the batch is large enough to be compute-visible (f32 accumulate kept).
    """
    squeeze = False
    if x.ndim == 2:
        x = x[None]
        squeeze = True
    B, S, H = x.shape
    assert S == H, (
        "reference forward's `attention_weights * value` elementwise multiply "
        "requires seq_len == hidden_dim")
    bt = min(block_b, B)
    assert B % bt == 0, "batch must be a multiple of block_b"

    # Fuse the three projections: single [H, 3H] weight (transposed to
    # in->out) and a single [1, 3H] bias operand (2 small DMAs instead of 6).
    wqkv = jnp.concatenate([wq.T, wk.T, wv.T], axis=1)            # [H, 3H]
    bqkv = jnp.concatenate([bq, bk, bv], axis=0).reshape(1, 3 * H)

    kernel = partial(_attention_kernel, hidden_dim=H, matmul_dtype=matmul_dtype)

    out = pl.pallas_call(
        kernel,
        out_shape=jax.ShapeDtypeStruct((B, S, H), x.dtype),
        grid=(B // bt,),
        in_specs=[
            pl.BlockSpec((bt, S, H), lambda b: (b, 0, 0)),        # x block
            pl.BlockSpec((H, 3 * H), lambda b: (0, 0)),           # fused W
            pl.BlockSpec((1, 3 * H), lambda b: (0, 0)),           # fused bias
        ],
        out_specs=pl.BlockSpec((bt, S, H), lambda b: (b, 0, 0)),
        compiler_params=pltpu.CompilerParams(
            dimension_semantics=("parallel",)),
    )(x, wqkv, bqkv)

    return out[0] if squeeze else out


def _init_linear(key, hidden_dim):
    """Deterministic nn.Linear-style init: W [out, in], b [out]."""
    kw, kb = jax.random.split(key)
    bound = 1.0 / math.sqrt(hidden_dim)
    w = jax.random.uniform(kw, (hidden_dim, hidden_dim), jnp.float32,
                           minval=-bound, maxval=bound)
    b = jax.random.uniform(kb, (hidden_dim,), jnp.float32,
                           minval=-bound, maxval=bound)
    return w, b


if __name__ == "__main__":
    # seq == hidden_dim is required by the reference forward's broadcast.
    seq = 32
    hidden_dim = 32
    num_heads = 4   # present in the module __init__ but unused by forward
    batch = 16      # independent [seq, hidden] problems processed via the grid

    root = jax.random.PRNGKey(0)
    kx, kq, kk, kv = jax.random.split(root, 4)

    x = jax.random.normal(kx, (batch, seq, hidden_dim), jnp.float32)
    wq, bq = _init_linear(kq, hidden_dim)   # torch layout [out, in]
    wk, bk = _init_linear(kk, hidden_dim)
    wv, bv = _init_linear(kv, hidden_dim)

    out = attention_layer(x, wq, bq, wk, bk, wv, bv, block_b=8)
    jax.block_until_ready(out)

    # Pure-JAX reference (same semantics as the PyTorch forward, eval mode).
    q = x @ wq.T + bq
    k = x @ wk.T + bk
    v = x @ wv.T + bv
    s = jnp.einsum("bqd,bkd->bqk", q, k) / math.sqrt(hidden_dim)
    ref = jax.nn.softmax(s, axis=-1) * v

    # Tolerance loosened slightly for pl.reciprocal(approx=True).
    max_err = jnp.max(jnp.abs(out - ref))
    assert jnp.allclose(out, ref, atol=2e-3, rtol=2e-3), (
        f"mismatch vs reference: max abs err {max_err}")

    print("KERNEL_OK")
</pallas_src>

<mosaic_0001>
module attributes {stable_mosaic.version = 11 : i64} {
  func.func @_attention_kernel(%arg0: i32, %arg1: memref<8x32x32xf32, #tpu.memory_space<vmem>>, %arg2: memref<32x96xf32, #tpu.memory_space<vmem>>, %arg3: memref<1x96xf32, #tpu.memory_space<vmem>>, %arg4: memref<8x32x32xf32, #tpu.memory_space<vmem>>) attributes {dimension_semantics = [#tpu.dimension_semantics<parallel>], iteration_bounds = array<i64: 2>, scalar_prefetch = 0 : i64, scratch_operands = 0 : i64, tpu.core_type = #tpu.core_type<tc>, window_params = [{transform_indices = @transform_0, window_bounds = array<i64: 8, 32, 32>}, {pipeline_mode = #tpu.pipeline_mode<synchronous>, transform_indices = @transform_1, window_bounds = array<i64: 32, 96>}, {pipeline_mode = #tpu.pipeline_mode<synchronous>, transform_indices = @transform_2, window_bounds = array<i64: 1, 96>}, {transform_indices = @transform_3, window_bounds = array<i64: 8, 32, 32>}]} {
    %c0 = arith.constant 0 : index
    %c0_0 = arith.constant 0 : index
    %c0_1 = arith.constant 0 : index
    %0 = vector.load %arg1[%c0, %c0_0, %c0_1] : memref<8x32x32xf32, #tpu.memory_space<vmem>>, vector<8x32x32xf32>
    %1 = vector.shape_cast %0 : vector<8x32x32xf32> to vector<256x32xf32>
    %c0_2 = arith.constant 0 : index
    %c0_3 = arith.constant 0 : index
    %2 = vector.load %arg2[%c0_2, %c0_3] : memref<32x96xf32, #tpu.memory_space<vmem>>, vector<32x96xf32>
    %cst = arith.constant dense<0.000000e+00> : vector<256x96xf32>
    %3 = tpu.matmul %1, %2, %cst {dimension_numbers = #tpu.dot_dimension_numbers<[1], [0], [0], [1], [0, 0, 1, 1], [], []>} : vector<256x32xf32>, vector<32x96xf32>, vector<256x96xf32> -> vector<256x96xf32>
    %c0_4 = arith.constant 0 : index
    %c0_5 = arith.constant 0 : index
    %4 = vector.load %arg3[%c0_4, %c0_5] : memref<1x96xf32, #tpu.memory_space<vmem>>, vector<1x96xf32>
    %5 = vector.broadcast %4 : vector<1x96xf32> to vector<256x96xf32>
    %6 = arith.addf %3, %5 : vector<256x96xf32>
    %7 = vector.extract_strided_slice %6 {offsets = [0, 0], sizes = [256, 32], strides = [1, 1]} : vector<256x96xf32> to vector<256x32xf32>
    %8 = vector.shape_cast %7 : vector<256x32xf32> to vector<8x32x32xf32>
    %9 = vector.extract_strided_slice %6 {offsets = [0, 32], sizes = [256, 32], strides = [1, 1]} : vector<256x96xf32> to vector<256x32xf32>
    %10 = vector.shape_cast %9 : vector<256x32xf32> to vector<8x32x32xf32>
    %11 = vector.extract_strided_slice %6 {offsets = [0, 64], sizes = [256, 32], strides = [1, 1]} : vector<256x96xf32> to vector<256x32xf32>
    %12 = vector.shape_cast %11 : vector<256x32xf32> to vector<8x32x32xf32>
    %cst_6 = arith.constant dense<0.000000e+00> : vector<8x32x32xf32>
    %13 = tpu.matmul %8, %10, %cst_6 {dimension_numbers = #tpu.dot_dimension_numbers<[2], [2], [1], [1], [0, 0, 0, 1, 1, 1], [0], [0]>} : vector<8x32x32xf32>, vector<8x32x32xf32>, vector<8x32x32xf32> -> vector<8x32x32xf32>
    %cst_7 = arith.constant 0.176776692 : f32
    %14 = vector.broadcast %cst_7 : f32 to vector<8x32x32xf32>
    %15 = arith.mulf %13, %14 : vector<8x32x32xf32>
    %cst_8 = arith.constant dense<0xFF800000> : vector<8x32xf32>
    %16 = vector.multi_reduction <maximumf>, %15, %cst_8 [2] : vector<8x32x32xf32> to vector<8x32xf32>
    %17 = vector.shape_cast %16 : vector<8x32xf32> to vector<8x32x1xf32>
    %18 = vector.broadcast %17 : vector<8x32x1xf32> to vector<8x32x32xf32>
    %19 = arith.subf %15, %18 : vector<8x32x32xf32>
    %20 = math.exp %19 : vector<8x32x32xf32>
    %cst_9 = arith.constant dense<0.000000e+00> : vector<8x32xf32>
    %21 = vector.multi_reduction <add>, %20, %cst_9 [2] : vector<8x32x32xf32> to vector<8x32xf32>
    %22 = vector.shape_cast %21 : vector<8x32xf32> to vector<8x32x1xf32>
    %23 = tpu.reciprocal %22 {approx = true} : vector<8x32x1xf32> -> vector<8x32x1xf32>
    %24 = vector.broadcast %23 : vector<8x32x1xf32> to vector<8x32x32xf32>
    %25 = arith.mulf %20, %24 : vector<8x32x32xf32>
    %26 = arith.mulf %25, %12 : vector<8x32x32xf32>
    %c0_10 = arith.constant 0 : index
    %c0_11 = arith.constant 0 : index
    %c0_12 = arith.constant 0 : index
    %27 = vector.load %arg4[%c0_10, %c0_11, %c0_12] : memref<8x32x32xf32, #tpu.memory_space<vmem>>, vector<8x32x32xf32>
    tpu.vector_store %arg4[%c0_10, %c0_11, %c0_12], %26 {strides = array<i32>} : memref<8x32x32xf32, #tpu.memory_space<vmem>>, vector<8x32x32xf32>,
    return
  }
  func.func @transform_0(%arg0: i32) -> (i32, i32, i32) {
    %c0_i32 = arith.constant 0 : i32
    %c0_i32_0 = arith.constant 0 : i32
    %c0_i32_1 = arith.constant 0 : i32
    return %arg0, %c0_i32, %c0_i32_0 : i32, i32, i32
  }
  func.func @transform_1(%arg0: i32) -> (i32, i32) {
    %c0_i32 = arith.constant 0 : i32
    %c0_i32_0 = arith.constant 0 : i32
    %c0_i32_1 = arith.constant 0 : i32
    return %c0_i32, %c0_i32_0 : i32, i32
  }
  func.func @transform_2(%arg0: i32) -> (i32, i32) {
    %c0_i32 = arith.constant 0 : i32
    %c0_i32_0 = arith.constant 0 : i32
    %c0_i32_1 = arith.constant 0 : i32
    return %c0_i32, %c0_i32_0 : i32, i32
  }
  func.func @transform_3(%arg0: i32) -> (i32, i32, i32) {
    %c0_i32 = arith.constant 0 : i32
    %c0_i32_0 = arith.constant 0 : i32
    %c0_i32_1 = arith.constant 0 : i32
    return %arg0, %c0_i32, %c0_i32_0 : i32, i32, i32
  }
}

</mosaic_0001>

<llo_original>
// kernel: tpu_custom_call.1
$region0: #{tpu_custom_call.1}
  #allocation0 [shape = 'u32[]', space=smem, size = 0x4, offset = 0x4, fixed_abs, tag = 'smem constant byte address 0x4 - core index']
  #allocation1 [shape = 'u32[144,128]{1,0:T(1,128)}', space=vmem, size = 0x12000, scoped, tag = 'internal scratch']
  %s0 = inlined_call_operand.hbm [shape: f32[16,32,32], index: 0, kind: input, shape index: {}]
  %s1 = inlined_call_operand.hbm [shape: f32[32,96], index: 1, kind: input, shape index: {}]
  %s2 = inlined_call_operand.vmem [shape: f32[1,96], index: 2, kind: input, shape index: {}]
  %s3 = inlined_call_operand.hbm [shape: f32[16,32,32], index: 3, kind: output, shape index: {}]
  %s4 = sld [smem:[#allocation0]]
  $region53: #{tpu_custom_call.1} parent=0
    _
  %s6 = ssub.s32 1, %s4
  %s7 = scalar_select 0, %s6, %s4
  $region1: #{tpu_custom_call.1} parent=0
    #allocation2 [shape = 'u8[262144]{0}', space=vmem, size = 0x40000, scoped, tag = 'input window, operand 0']
    #allocation3 [shape = 's32[2]{0}', space=sflag, size = 0x8, scoped, tag = 'scoped memory for tpu_custom_call.1']
    #allocation4 [shape = 's32[2]{0}', space=sflag, size = 0x8, scoped, tag = 'scoped memory for tpu_custom_call.1']
    #allocation5 [shape = 'u8[16384]{0}', space=vmem, size = 0x4000, scoped, tag = 'input window, operand 1, single buffered']
    #allocation6 [shape = 's32[1]{0}', space=sflag, size = 0x4, scoped, tag = 'scoped memory for tpu_custom_call.1']
    #allocation7 [shape = 'u8[262144]{0}', space=vmem, size = 0x40000, scoped, tag = 'output window, operand 0']
    %8 = vsyncpa [#allocation3], 0
    %s9 = scalar_lea.sflag [#allocation3], 1
    %10 = vsyncpa %s9, 0
    %11 = vsyncpa [#allocation6], 0
    %12 = vsyncpa [#allocation4], 0
    %s13 = scalar_lea.sflag [#allocation4], 1
    %14 = vsyncpa %s13, 0
    loop: start=0, step=1, limit=4
    $region2: #{tpu_custom_call.1} parent=1 // loop_pre_header
      _
    $region3: #{tpu_custom_call.1} parent=1 // loop_header
      %s16 = sphi 0, %s20
      %p17 = scmp.ge.s32.totalorder %s16, 4
      %s26 = sphi 0, %s28
      %s29 = sphi 0, %s26
      %s30 = sphi 0, %s29
      %s46 = sphi 0, %s30
      %s50 = sphi 0, %s50
      %s52 = sphi 0, %s50
      %s53 = sphi 0, %s52
      %s67 = sphi 0, %s53
      %s71 = sphi 0, %s71
      %s73 = sphi 0, %s71
      %s74 = sphi 0, %s73
      %s88 = sphi 0, %s74
      %s94 = sphi 0, %s96
      %s97 = sphi 0, %s94
      %s98 = sphi 0, %s97
      %s114 = sphi 0, %s98
    $region4: #{tpu_custom_call.1} parent=1 // loop_header_branch
      %19 = sbr.rel (%p17) target = $region8
    $region5: #{tpu_custom_call.1} parent=1 // loop_body
      %s21 = ssub.s32 %s16, 1
      %s22 = ssub.s32 %s16, 2
      %s23 = sadd.s32 %s16, 1
      %s24 = ssub.s32 %s16, %s23
      %p25 = scmp.eq.s32.totalorder %s24, 0
      %s27 = sadd.s32 %s26, 1
      %s28 = scalar_select %p25, %s26, %s27
      %p31 = pneg %p25
      %p32 = scmp.eq.s32.totalorder %s16, 1
      %p33 = por %p31, %p32
      %p34 = scmp.ne.s32.totalorder %s26, %s29
      %p35 = scmp.eq.s32.totalorder %s16, 0
      %p36 = por %p34, %p35
      %p37 = scmp.ne.s32.totalorder %s26, %s29
      %p38 = scmp.eq.s32.totalorder %s21, 1
      %p39 = por %p37, %p38
      %p40 = scmp.ne.s32.totalorder %s29, %s30
      %p41 = scmp.eq.s32.totalorder %s21, 0
      %p42 = por %p40, %p41
      %p43 = scmp.ne.s32.totalorder %s29, %s30
      %p44 = scmp.eq.s32.totalorder %s22, 1
      %p45 = por %p43, %p44
      %p47 = scmp.ne.s32.totalorder %s30, %s46
      %p48 = scmp.eq.s32.totalorder %s22, 0
      %p49 = por %p47, %p48
      %s51 = sadd.s32 %s50, 1
      %p54 = scmp.eq.s32.totalorder %s16, 1
      %p55 = scmp.ne.s32.totalorder %s50, %s52
      %p56 = scmp.eq.s32.totalorder %s16, 0
      %p57 = por %p55, %p56
      %p58 = scmp.ne.s32.totalorder %s50, %s52
      %p59 = scmp.eq.s32.totalorder %s21, 1
      %p60 = por %p58, %p59
      %p61 = scmp.ne.s32.totalorder %s52, %s53
      %p62 = scmp.eq.s32.totalorder %s21, 0
      %p63 = por %p61, %p62
      %p64 = scmp.ne.s32.totalorder %s52, %s53
      %p65 = scmp.eq.s32.totalorder %s22, 1
      %p66 = por %p64, %p65
      %p68 = scmp.ne.s32.totalorder %s53, %s67
      %p69 = scmp.eq.s32.totalorder %s22, 0
      %p70 = por %p68, %p69
      %s72 = sadd.s32 %s71, 1
      %p75 = scmp.eq.s32.totalorder %s16, 1
      %p76 = scmp.ne.s32.totalorder %s71, %s73
      %p77 = scmp.eq.s32.totalorder %s16, 0
      %p78 = por %p76, %p77
      %p79 = scmp.ne.s32.totalorder %s71, %s73
      %p80 = scmp.eq.s32.totalorder %s21, 1
      %p81 = por %p79, %p80
      %p82 = scmp.ne.s32.totalorder %s73, %s74
      %p83 = scmp.eq.s32.totalorder %s21, 0
      %p84 = por %p82, %p83
      %p85 = scmp.ne.s32.totalorder %s73, %s74
      %p86 = scmp.eq.s32.totalorder %s22, 1
      %p87 = por %p85, %p86
      %p89 = scmp.ne.s32.totalorder %s74, %s88
      %p90 = scmp.eq.s32.totalorder %s22, 0
      %p91 = por %p89, %p90
      %s92 = ssub.s32 %s16, %s23
      %p93 = scmp.eq.s32.totalorder %s92, 0
      %s95 = sadd.s32 %s94, 1
      %s96 = scalar_select %p93, %s94, %s95
      %p99 = pneg %p93
      %p100 = scmp.eq.s32.totalorder %s16, 1
      %p101 = por %p99, %p100
      %p102 = scmp.ne.s32.totalorder %s94, %s97
      %p103 = scmp.eq.s32.totalorder %s16, 0
      %p104 = por %p102, %p103
      %p105 = scmp.ne.s32.totalorder %s94, %s97
      %p106 = scmp.eq.s32.totalorder %s21, 1
      %p107 = por %p105, %p106
      %p108 = scmp.ne.s32.totalorder %s97, %s98
      %p109 = scmp.eq.s32.totalorder %s21, 0
      %p110 = por %p108, %p109
      %p111 = scmp.ne.s32.totalorder %s97, %s98
      %p112 = scmp.eq.s32.totalorder %s22, 1
      %p113 = por %p111, %p112
      %p115 = scmp.ne.s32.totalorder %s98, %s114
      %p116 = scmp.eq.s32.totalorder %s22, 0
      %p117 = por %p115, %p116
      %p118 = scmp.le.s32.totalorder 1, %s16
      %p119 = scmp.lt.s32.totalorder %s16, 3
      %p120 = pnand %p118, %p119
      %p121 = pneg %p120
      // Predicated region
      $region9: #{tpu_custom_call.1} parent=5 // pred_check
        _
      $region10: #{tpu_custom_call.1} parent=5 // pred_check_branch
        %123 = sbr.rel (%p120) target = $region12
      $region11: #{tpu_custom_call.1} parent=5 // pred_region
        %s124 = ssub.s32 %s16, 1
        // Predicated region
        $region13: #{tpu_custom_call.1} parent=11 // pred_check
          %p125 = pneg %p63
        $region14: #{tpu_custom_call.1} parent=11 // pred_check_branch
          %127 = sbr.rel (%p125) target = $region16
        $region15: #{tpu_custom_call.1} parent=11 // pred_region
          %s129 = ssub.s32 512, 512
          %130 = vsyncadd [#allocation6], %s129
          %s131 = sshll.u32 [#allocation5], 4
          %s132 = int_to_ptr.vmem [resolvable:$true] %s131
          %137 = dma.hbm_to_vmem [thread:$0]  %s1, 512, %s132, [#allocation6], 128, 128, 8
        $region16: #{tpu_custom_call.1} parent=11 // pred_fallthru
          _
        // Predicated region
        $region17: #{tpu_custom_call.1} parent=11 // pred_check
          %p138 = pneg %p84
        $region18: #{tpu_custom_call.1} parent=11 // pred_check_branch
          %140 = sbr.rel (%p138) target = $region20
        $region19: #{tpu_custom_call.1} parent=11 // pred_region
          _
        $region20: #{tpu_custom_call.1} parent=11 // pred_fallthru
          _
      $region12: #{tpu_custom_call.1} parent=5 // pred_fallthru
        _
      %p141 = scmp.lt.s32.totalorder %s16, 2
      // Predicated region
      $region21: #{tpu_custom_call.1} parent=5 // pred_check
        %p142 = pneg %p141
      $region22: #{tpu_custom_call.1} parent=5 // pred_check_branch
        %144 = sbr.rel (%p142) target = $region24
      $region23: #{tpu_custom_call.1} parent=5 // pred_region
        // Predicated region
        $region25: #{tpu_custom_call.1} parent=23 // pred_check
          %p145 = pneg %p36
        $region26: #{tpu_custom_call.1} parent=23 // pred_check_branch
          %147 = sbr.rel (%p145) target = $region28
        $region27: #{tpu_custom_call.1} parent=23 // pred_region
          %s148 = sand.u32 %s26, 1
          %s149 = scalar_lea.sflag [#allocation3], %s148
          %s150 = sand.u32 %s26, 1
          %s151 = smul.addr %s150, 256
          %s152 = scalar_lea.vmem [#allocation2], %s151
          %s153 = smul.u32 8, %s16
          %s155 = ssub.s32 4096, 4096
          %156 = vsyncadd %s149, %s155
          %s157 = smul.addr %s153, 4
          %s158 = smul.addr %s157, 128
          %s159 = scalar_lea.hbm %s0, %s158
          %s160 = sshll.u32 %s152, 4
          %s161 = int_to_ptr.vmem [resolvable:$true] %s160
          %166 = dma.hbm_to_vmem [thread:$0]  %s159, 4096, %s161, %s149, 128, 128, 8
        $region28: #{tpu_custom_call.1} parent=23 // pred_fallthru
          _
      $region24: #{tpu_custom_call.1} parent=5 // pred_fallthru
        _
      %p167 = scmp.le.s32.totalorder 1, %s16
      %p168 = scmp.lt.s32.totalorder %s16, 3
      %p169 = pnand %p167, %p168
      %p170 = pneg %p169
      // Predicated region
      $region29: #{tpu_custom_call.1} parent=5 // pred_check
        _
      $region30: #{tpu_custom_call.1} parent=5 // pred_check_branch
        %172 = sbr.rel (%p169) target = $region32
      $region31: #{tpu_custom_call.1} parent=5 // pred_region
        %s173 = ssub.s32 %s16, 1
        %s174 = sand.u32 %s29, 1
        %s175 = scalar_lea.sflag [#allocation3], %s174
        %s176 = sand.u32 %s29, 1
        %s177 = smul.addr %s176, 256
        %s178 = scalar_lea.vmem [#allocation2], %s177
        // Predicated region
        $region33: #{tpu_custom_call.1} parent=31 // pred_check
          %p179 = pneg %p42
        $region34: #{tpu_custom_call.1} parent=31 // pred_check_branch
          %181 = sbr.rel (%p179) target = $region36
        $region35: #{tpu_custom_call.1} parent=31 // pred_region
          %182 = dma.done %s175, 4096
        $region36: #{tpu_custom_call.1} parent=31 // pred_fallthru
          _
        // Predicated region
        $region37: #{tpu_custom_call.1} parent=31 // pred_check
          %p183 = pneg %p63
        $region38: #{tpu_custom_call.1} parent=31 // pred_check_branch
          %185 = sbr.rel (%p183) target = $region40
        $region39: #{tpu_custom_call.1} parent=31 // pred_region
          %186 = dma.done [#allocation6], 512
        $region40: #{tpu_custom_call.1} parent=31 // pred_fallthru
          _
        %s187 = sand.u32 %s29, 1
        %s188 = scalar_lea.sflag [#allocation3], %s187
        %s189 = sand.u32 %s29, 1
        %s190 = smul.addr %s189, 256
        %s191 = scalar_lea.vmem [#allocation2], %s190
        %p192 = pneg %p42
        %p193 = pneg %p39
        %p194 = pneg %p63
        %p195 = pneg %p60
        %p196 = pneg %p84
        %p197 = pneg %p81
        %p198 = pneg %p110
        %p199 = pneg %p107
        %s200 = sand.u32 %s97, 1
        %s201 = scalar_lea.sflag [#allocation4], %s200
        %s202 = sand.u32 %s97, 1
        %s203 = smul.addr %s202, 256
        %s204 = scalar_lea.vmem [#allocation7], %s203
        %s205 = smul.u32 8, %s21
        %s206 = smul.u32 8, %s21
        %v207 = vld [vmem:[%s178] sm:$0xff]
        %v208 = vld [vmem:[%s178 + $0x8] sm:$0xff]
        %v209 = vld [vmem:[%s178 + $0x10] sm:$0xff]
        %v210 = vld [vmem:[%s178 + $0x18] sm:$0xff]
        %v211 = vld [vmem:[%s178 + $0x20] sm:$0xff]
        %v212 = vld [vmem:[%s178 + $0x28] sm:$0xff]
        %v213 = vld [vmem:[%s178 + $0x30] sm:$0xff]
        %v214 = vld [vmem:[%s178 + $0x38] sm:$0xff]
        %v215 = vld [vmem:[%s178 + $0x40] sm:$0xff]
        %v216 = vld [vmem:[%s178 + $0x48] sm:$0xff]
        %v217 = vld [vmem:[%s178 + $0x50] sm:$0xff]
        %v218 = vld [vmem:[%s178 + $0x58] sm:$0xff]
        %v219 = vld [vmem:[%s178 + $0x60] sm:$0xff]
        %v220 = vld [vmem:[%s178 + $0x68] sm:$0xff]
        %v221 = vld [vmem:[%s178 + $0x70] sm:$0xff]
        %v222 = vld [vmem:[%s178 + $0x78] sm:$0xff]
        %v223 = vld [vmem:[%s178 + $0x80] sm:$0xff]
        %v224 = vld [vmem:[%s178 + $0x88] sm:$0xff]
        %v225 = vld [vmem:[%s178 + $0x90] sm:$0xff]
        %v226 = vld [vmem:[%s178 + $0x98] sm:$0xff]
        %v227 = vld [vmem:[%s178 + $0xa0] sm:$0xff]
        %v228 = vld [vmem:[%s178 + $0xa8] sm:$0xff]
        %v229 = vld [vmem:[%s178 + $0xb0] sm:$0xff]
        %v230 = vld [vmem:[%s178 + $0xb8] sm:$0xff]
        %v231 = vld [vmem:[%s178 + $0xc0] sm:$0xff]
        %v232 = vld [vmem:[%s178 + $0xc8] sm:$0xff]
        %v233 = vld [vmem:[%s178 + $0xd0] sm:$0xff]
        %v234 = vld [vmem:[%s178 + $0xd8] sm:$0xff]
        %v235 = vld [vmem:[%s178 + $0xe0] sm:$0xff]
        %v236 = vld [vmem:[%s178 + $0xe8] sm:$0xff]
        %v237 = vld [vmem:[%s178 + $0xf0] sm:$0xff]
        %v238 = vld [vmem:[%s178 + $0xf8] sm:$0xff]
        %v239 = vld [vmem:[#allocation5] sm:$0xff]
        %v240 = vld [vmem:[#allocation5 + $0x8] sm:$0xff]
        %v241 = vld [vmem:[#allocation5 + $0x10] sm:$0xff]
        %v242 = vld [vmem:[#allocation5 + $0x18] sm:$0xff]
        %v243 = vld [vmem:[%s2] sm:$0x1]
        %v245 = vlaneseq
        %v246 = vshrl.u32 %v245, 7
        %v247 = vsub.s32 0, %v246
        %v248 = vrot.slane %v243, %v247
        %vm250 = vcmask 261120
        %v252 = vsel %vm250, %v207, 0
        %v255 = vsel %vm250, %v208, 0
        %v258 = vsel %vm250, %v209, 0
        %v261 = vsel %vm250, %v210, 0
        %v264 = vsel %vm250, %v211, 0
        %v267 = vsel %vm250, %v212, 0
        %v270 = vsel %vm250, %v213, 0
        %v273 = vsel %vm250, %v214, 0
        %v276 = vsel %vm250, %v215, 0
        %v279 = vsel %vm250, %v216, 0
        %v282 = vsel %vm250, %v217, 0
        %v285 = vsel %vm250, %v218, 0
        %v288 = vsel %vm250, %v219, 0
        %v291 = vsel %vm250, %v220, 0
        %v294 = vsel %vm250, %v221, 0
        %v297 = vsel %vm250, %v222, 0
        %v300 = vsel %vm250, %v223, 0
        %v303 = vsel %vm250, %v224, 0
        %v306 = vsel %vm250, %v225, 0
        %v309 = vsel %vm250, %v226, 0
        %v312 = vsel %vm250, %v227, 0
        %v315 = vsel %vm250, %v228, 0
        %v318 = vsel %vm250, %v229, 0
        %v321 = vsel %vm250, %v230, 0
        %v324 = vsel %vm250, %v231, 0
        %v327 = vsel %vm250, %v232, 0
        %v330 = vsel %vm250, %v233, 0
        %v333 = vsel %vm250, %v234, 0
        %v336 = vsel %vm250, %v235, 0
        %v339 = vsel %vm250, %v236, 0
        %v342 = vsel %vm250, %v237, 0
        %v345 = vsel %vm250, %v238, 0
        %347 = vmatprep.subr.mxu0 0.0
        %348 = vmatpush1.msra.mxu0 %v239
        %349 = vmatprep.subr.mxu0 0.0
        %350 = vmatpush1.msra.mxu0 %v240
        %351 = vmatprep.subr.mxu0 0.0
        %352 = vmatpush1.msra.mxu0 %v241
        %353 = vmatprep.subr.mxu0 0.0
        %354 = vmatpush1.msra.mxu0 %v242
        %355 = vmatprep.subr.mxu0 0.0
        %356 = vmatpush1.msra.mxu0 0.0
        %357 = vmatprep.subr.mxu0 0.0
        %358 = vmatpush1.msra.mxu0 0.0
        %359 = vmatprep.subr.mxu0 0.0
        %360 = vmatpush1.msra.mxu0 0.0
        %361 = vmatprep.subr.mxu0 0.0
        %362 = vmatpush1.msra.mxu0 0.0
        %363 = vmatprep.subr.mxu0 0.0
        %364 = vmatpush1.msra.mxu0 0.0
        %365 = vmatprep.subr.mxu0 0.0
        %366 = vmatpush1.msra.mxu0 0.0
        %367 = vmatprep.subr.mxu0 0.0
        %368 = vmatpush1.msra.mxu0 0.0
        %369 = vmatprep.subr.mxu0 0.0
        %370 = vmatpush1.msra.mxu0 0.0
        %371 = vmatprep.subr.mxu0 0.0
        %372 = vmatpush1.msra.mxu0 0.0
        %373 = vmatprep.subr.mxu0 0.0
        %374 = vmatpush1.msra.mxu0 0.0
        %375 = vmatprep.subr.mxu0 0.0
        %376 = vmatpush1.msra.mxu0 0.0
        %377 = vmatprep.subr.mxu0 0.0
        %378 = vmatpush1.msra.mxu0 0.0
        %379 = vmatprep.subr.mxu0 0.0
        %380 = vmatpush1.msra.mxu0 0.0
        %381 = vmatprep.subr.mxu0 0.0
        %382 = vmatpush1.msra.mxu0 0.0
        %383 = vmatprep.subr.mxu0 0.0
        %384 = vmatpush1.msra.mxu0 0.0
        %385 = vmatprep.subr.mxu0 0.0
        %386 = vmatpush1.msra.mxu0 0.0
        %387 = vmatprep.subr.mxu0 0.0
        %388 = vmatpush1.msra.mxu0 0.0
        %389 = vmatprep.subr.mxu0 0.0
        %390 = vmatpush1.msra.mxu0 0.0
        %391 = vmatprep.subr.mxu0 0.0
        %392 = vmatpush1.msra.mxu0 0.0
        %393 = vmatprep.subr.mxu0 0.0
        %394 = vmatpush1.msra.mxu0 0.0
        %395 = vmatprep.subr.mxu0 0.0
        %396 = vmatpush1.msra.mxu0 0.0
        %397 = vmatprep.subr.mxu0 0.0
        %398 = vmatpush1.msra.mxu0 0.0
        %399 = vmatprep.subr.mxu0 0.0
        %400 = vmatpush1.msra.mxu0 0.0
        %401 = vmatprep.subr.mxu0 0.0
        %402 = vmatpush1.msra.mxu0 0.0
        %403 = vmatprep.subr.mxu0 0.0
        %404 = vmatpush1.msra.mxu0 0.0
        %405 = vmatprep.subr.mxu0 0.0
        %406 = vmatpush1.msra.mxu0 0.0
        %407 = vmatprep.subr.mxu0 0.0
        %408 = vmatpush1.msra.mxu0 0.0
        %409 = vmatprep.subr.mxu0 0.0
        %410 = vmatpush1.msra.mxu0 0.0
        %411 = vmatprep.mubr.f32.mxu0 0.0
        %412 = vmatmul.mubr.f32.gmra.mrb[0].mxu0 %v252
        %v413 = vpop.f32.mrb[0].mxu0
        %v414 = vadd.f32 %v248, %v413
        %v415 = vpop.f32.mrb[0].mxu0
        %416 = vmatprep.mubr.f32.mxu0 0.0
        %417 = vmatmul.mubr.f32.gmra.mrb[0].mxu0 %v255
        %v418 = vpop.f32.mrb[0].mxu0
        %v419 = vadd.f32 %v248, %v418
        %v420 = vpop.f32.mrb[0].mxu0
        %421 = vmatprep.mubr.f32.mxu0 0.0
        %422 = vmatmul.mubr.f32.gmra.mrb[0].mxu0 %v258
        %v423 = vpop.f32.mrb[0].mxu0
        %v424 = vadd.f32 %v248, %v423
        %v425 = vpop.f32.mrb[0].mxu0
        %426 = vmatprep.mubr.f32.mxu0 0.0
        %427 = vmatmul.mubr.f32.gmra.mrb[0].mxu0 %v261
        %v428 = vpop.f32.mrb[0].mxu0
        %v429 = vadd.f32 %v248, %v428
        %v430 = vpop.f32.mrb[0].mxu0
        %431 = vmatprep.mubr.f32.mxu0 0.0
        %432 = vmatmul.mubr.f32.gmra.mrb[0].mxu0 %v264
        %v433 = vpop.f32.mrb[0].mxu0
        %v434 = vadd.f32 %v248, %v433
        %v435 = vpop.f32.mrb[0].mxu0
        %436 = vmatprep.mubr.f32.mxu0 0.0
        %437 = vmatmul.mubr.f32.gmra.mrb[0].mxu0 %v267
        %v438 = vpop.f32.mrb[0].mxu0
        %v439 = vadd.f32 %v248, %v438
        %v440 = vpop.f32.mrb[0].mxu0
        %441 = vmatprep.mubr.f32.mxu0 0.0
        %442 = vmatmul.mubr.f32.gmra.mrb[0].mxu0 %v270
        %v443 = vpop.f32.mrb[0].mxu0
        %v444 = vadd.f32 %v248, %v443
        %v445 = vpop.f32.mrb[0].mxu0
        %446 = vmatprep.mubr.f32.mxu0 0.0
        %447 = vmatmul.mubr.f32.gmra.mrb[0].mxu0 %v273
        %v448 = vpop.f32.mrb[0].mxu0
        %v449 = vadd.f32 %v248, %v448
        %v450 = vpop.f32.mrb[0].mxu0
        %451 = vmatprep.mubr.f32.mxu0 0.0
        %452 = vmatmul.mubr.f32.gmra.mrb[0].mxu0 %v276
        %v453 = vpop.f32.mrb[0].mxu0
        %v454 = vadd.f32 %v248, %v453
        %v455 = vpop.f32.mrb[0].mxu0
        %456 = vmatprep.mubr.f32.mxu0 0.0
        %457 = vmatmul.mubr.f32.gmra.mrb[0].mxu0 %v279
        %v458 = vpop.f32.mrb[0].mxu0
        %v459 = vadd.f32 %v248, %v458
        %v460 = vpop.f32.mrb[0].mxu0
        %461 = vmatprep.mubr.f32.mxu0 0.0
        %462 = vmatmul.mubr.f32.gmra.mrb[0].mxu0 %v282
        %v463 = vpop.f32.mrb[0].mxu0
        %v464 = vadd.f32 %v248, %v463
        %v465 = vpop.f32.mrb[0].mxu0
        %466 = vmatprep.mubr.f32.mxu0 0.0
        %467 = vmatmul.mubr.f32.gmra.mrb[0].mxu0 %v285
        %v468 = vpop.f32.mrb[0].mxu0
        %v469 = vadd.f32 %v248, %v468
        %v470 = vpop.f32.mrb[0].mxu0
        %471 = vmatprep.mubr.f32.mxu0 0.0
        %472 = vmatmul.mubr.f32.gmra.mrb[0].mxu0 %v288
        %v473 = vpop.f32.mrb[0].mxu0
        %v474 = vadd.f32 %v248, %v473
        %v475 = vpop.f32.mrb[0].mxu0
        %476 = vmatprep.mubr.f32.mxu0 0.0
        %477 = vmatmul.mubr.f32.gmra.mrb[0].mxu0 %v291
        %v478 = vpop.f32.mrb[0].mxu0
        %v479 = vadd.f32 %v248, %v478
        %v480 = vpop.f32.mrb[0].mxu0
        %481 = vmatprep.mubr.f32.mxu0 0.0
        %482 = vmatmul.mubr.f32.gmra.mrb[0].mxu0 %v294
        %v483 = vpop.f32.mrb[0].mxu0
        %v484 = vadd.f32 %v248, %v483
        %v485 = vpop.f32.mrb[0].mxu0
        %486 = vmatprep.mubr.f32.mxu0 0.0
        %487 = vmatmul.mubr.f32.gmra.mrb[0].mxu0 %v297
        %v488 = vpop.f32.mrb[0].mxu0
        %v489 = vadd.f32 %v248, %v488
        %v490 = vpop.f32.mrb[0].mxu0
        %491 = vmatprep.mubr.f32.mxu0 0.0
        %492 = vmatmul.mubr.f32.gmra.mrb[0].mxu0 %v300
        %v493 = vpop.f32.mrb[0].mxu0
        %v494 = vadd.f32 %v248, %v493
        %v495 = vpop.f32.mrb[0].mxu0
        %496 = vmatprep.mubr.f32.mxu0 0.0
        %497 = vmatmul.mubr.f32.gmra.mrb[0].mxu0 %v303
        %v498 = vpop.f32.mrb[0].mxu0
        %v499 = vadd.f32 %v248, %v498
        %v500 = vpop.f32.mrb[0].mxu0
        %501 = vmatprep.mubr.f32.mxu0 0.0
        %502 = vmatmul.mubr.f32.gmra.mrb[0].mxu0 %v306
        %v503 = vpop.f32.mrb[0].mxu0
        %v504 = vadd.f32 %v248, %v503
        %v505 = vpop.f32.mrb[0].mxu0
        %506 = vmatprep.mubr.f32.mxu0 0.0
        %507 = vmatmul.mubr.f32.gmra.mrb[0].mxu0 %v309
        %v508 = vpop.f32.mrb[0].mxu0
        %v509 = vadd.f32 %v248, %v508
        %v510 = vpop.f32.mrb[0].mxu0
        %511 = vmatprep.mubr.f32.mxu0 0.0
        %512 = vmatmul.mubr.f32.gmra.mrb[0].mxu0 %v312
        %v513 = vpop.f32.mrb[0].mxu0
        %v514 = vadd.f32 %v248, %v513
        %v515 = vpop.f32.mrb[0].mxu0
        %516 = vmatprep.mubr.f32.mxu0 0.0
        %517 = vmatmul.mubr.f32.gmra.mrb[0].mxu0 %v315
        %v518 = vpop.f32.mrb[0].mxu0
        %v519 = vadd.f32 %v248, %v518
        %v520 = vpop.f32.mrb[0].mxu0
        %521 = vmatprep.mubr.f32.mxu0 0.0
        %522 = vmatmul.mubr.f32.gmra.mrb[0].mxu0 %v318
        %v523 = vpop.f32.mrb[0].mxu0
        %v524 = vadd.f32 %v248, %v523
        %v525 = vpop.f32.mrb[0].mxu0
        %526 = vmatprep.mubr.f32.mxu0 0.0
        %527 = vmatmul.mubr.f32.gmra.mrb[0].mxu0 %v321
        %v528 = vpop.f32.mrb[0].mxu0
        %v529 = vadd.f32 %v248, %v528
        %v530 = vpop.f32.mrb[0].mxu0
        %531 = vmatprep.mubr.f32.mxu0 0.0
        %532 = vmatmul.mubr.f32.gmra.mrb[0].mxu0 %v324
        %v533 = vpop.f32.mrb[0].mxu0
        %v534 = vadd.f32 %v248, %v533
        %v535 = vpop.f32.mrb[0].mxu0
        %536 = vmatprep.mubr.f32.mxu0 0.0
        %537 = vmatmul.mubr.f32.gmra.mrb[0].mxu0 %v327
        %v538 = vpop.f32.mrb[0].mxu0
        %v539 = vadd.f32 %v248, %v538
        %v540 = vpop.f32.mrb[0].mxu0
        %541 = vmatprep.mubr.f32.mxu0 0.0
        %542 = vmatmul.mubr.f32.gmra.mrb[0].mxu0 %v330
        %v543 = vpop.f32.mrb[0].mxu0
        %v544 = vadd.f32 %v248, %v543
        %v545 = vpop.f32.mrb[0].mxu0
        %546 = vmatprep.mubr.f32.mxu0 0.0
        %547 = vmatmul.mubr.f32.gmra.mrb[0].mxu0 %v333
        %v548 = vpop.f32.mrb[0].mxu0
        %v549 = vadd.f32 %v248, %v548
        %v550 = vpop.f32.mrb[0].mxu0
        %551 = vmatprep.mubr.f32.mxu0 0.0
        %552 = vmatmul.mubr.f32.gmra.mrb[0].mxu0 %v336
        %v553 = vpop.f32.mrb[0].mxu0
        %v554 = vadd.f32 %v248, %v553
        %v555 = vpop.f32.mrb[0].mxu0
        %556 = vmatprep.mubr.f32.mxu0 0.0
        %557 = vmatmul.mubr.f32.gmra.mrb[0].mxu0 %v339
        %v558 = vpop.f32.mrb[0].mxu0
        %v559 = vadd.f32 %v248, %v558
        %v560 = vpop.f32.mrb[0].mxu0
        %561 = vmatprep.mubr.f32.mxu0 0.0
        %562 = vmatmul.mubr.f32.gmra.mrb[0].mxu0 %v342
        %v563 = vpop.f32.mrb[0].mxu0
        %v564 = vadd.f32 %v248, %v563
        %v565 = vpop.f32.mrb[0].mxu0
        %566 = vmatprep.mubr.f32.mxu0 0.0
        %567 = vmatmul.mubr.f32.gmra.mrb[0].mxu0 %v345
        %v568 = vpop.f32.mrb[0].mxu0
        %v569 = vadd.f32 %v248, %v568
        %v570 = vpop.f32.mrb[0].mxu0
        %571 = vdwg.mxu0
        %576 = vrot.lane.b32.xlu0 %v414, 96
        %v577 = vpop.permute.xlu0 %576
        %578 = vrot.lane.b32.xlu0 %v419, 96
        %v579 = vpop.permute.xlu0 %578
        %580 = vrot.lane.b32.xlu0 %v424, 96
        %v581 = vpop.permute.xlu0 %580
        %582 = vrot.lane.b32.xlu0 %v429, 96
        %v583 = vpop.permute.xlu0 %582
        %v584 = vsel %vm250, %v414, 0
        %v586 = vsel %vm250, %v419, 0
        %v588 = vsel %vm250, %v424, 0
        %v590 = vsel %vm250, %v429, 0
        %v592 = vsel %vm250, %v577, 0
        %v594 = vsel %vm250, %v579, 0
        %v596 = vsel %vm250, %v581, 0
        %v598 = vsel %vm250, %v583, 0
        %600 = vmatprep.subr.mxu0 0.0
        %601 = vmatpush1.xpose.msra.mxu0 %v592
        %602 = vmatprep.subr.mxu0 0.0
        %603 = vmatpush1.xpose.msra.mxu0 %v594
        %604 = vmatprep.subr.mxu0 0.0
        %605 = vmatpush1.xpose.msra.mxu0 %v596
        %606 = vmatprep.subr.mxu0 0.0
        %607 = vmatpush1.xpose.msra.mxu0 %v598
        %608 = vmatprep.subr.mxu0 0.0
        %609 = vmatpush1.xpose.msra.mxu0 0.0
        %610 = vmatprep.subr.mxu0 0.0
        %611 = vmatpush1.xpose.msra.mxu0 0.0
        %612 = vmatprep.subr.mxu0 0.0
        %613 = vmatpush1.xpose.msra.mxu0 0.0
        %614 = vmatprep.subr.mxu0 0.0
        %615 = vmatpush1.xpose.msra.mxu0 0.0
        %616 = vmatprep.subr.mxu0 0.0
        %617 = vmatpush1.xpose.msra.mxu0 0.0
        %618 = vmatprep.subr.mxu0 0.0
        %619 = vmatpush1.xpose.msra.mxu0 0.0
        %620 = vmatprep.subr.mxu0 0.0
        %621 = vmatpush1.xpose.msra.mxu0 0.0
        %622 = vmatprep.subr.mxu0 0.0
        %623 = vmatpush1.xpose.msra.mxu0 0.0
        %624 = vmatprep.subr.mxu0 0.0
        %625 = vmatpush1.xpose.msra.mxu0 0.0
        %626 = vmatprep.subr.mxu0 0.0
        %627 = vmatpush1.xpose.msra.mxu0 0.0
        %628 = vmatprep.subr.mxu0 0.0
        %629 = vmatpush1.xpose.msra.mxu0 0.0
        %630 = vmatprep.subr.mxu0 0.0
        %631 = vmatpush1.xpose.msra.mxu0 0.0
        %632 = vmatprep.subr.mxu0 0.0
        %633 = vmatpush1.xpose.msra.mxu0 0.0
        %634 = vmatprep.subr.mxu0 0.0
        %635 = vmatpush1.xpose.msra.mxu0 0.0
        %636 = vmatprep.subr.mxu0 0.0
        %637 = vmatpush1.xpose.msra.mxu0 0.0
        %638 = vmatprep.subr.mxu0 0.0
        %639 = vmatpush1.xpose.msra.mxu0 0.0
        %640 = vmatprep.subr.mxu0 0.0
        %641 = vmatpush1.xpose.msra.mxu0 0.0
        %642 = vmatprep.subr.mxu0 0.0
        %643 = vmatpush1.xpose.msra.mxu0 0.0
        %644 = vmatprep.subr.mxu0 0.0
        %645 = vmatpush1.xpose.msra.mxu0 0.0
        %646 = vmatprep.subr.mxu0 0.0
        %647 = vmatpush1.xpose.msra.mxu0 0.0
        %648 = vmatprep.subr.mxu0 0.0
        %649 = vmatpush1.xpose.msra.mxu0 0.0
        %650 = vmatprep.subr.mxu0 0.0
        %651 = vmatpush1.xpose.msra.mxu0 0.0
        %652 = vmatprep.subr.mxu0 0.0
        %653 = vmatpush1.xpose.msra.mxu0 0.0
        %654 = vmatprep.subr.mxu0 0.0
        %655 = vmatpush1.xpose.msra.mxu0 0.0
        %656 = vmatprep.subr.mxu0 0.0
        %657 = vmatpush1.xpose.msra.mxu0 0.0
        %658 = vmatprep.subr.mxu0 0.0
        %659 = vmatpush1.xpose.msra.mxu0 0.0
        %660 = vmatprep.subr.mxu0 0.0
        %661 = vmatpush1.xpose.msra.mxu0 0.0
        %662 = vmatprep.subr.mxu0 0.0
        %663 = vmatpush1.xpose.msra.mxu0 0.0
        %664 = vmatprep.mubr.f32.mxu0 0.0
        %665 = vmatmul.mubr.f32.gmra.mrb[0].mxu0 %v584
        %v666 = vpop.f32.mrb[0].mxu0
        %v667 = vadd.f32 0.0, %v666
        %v668 = vpop.f32.mrb[0].mxu0
        %669 = vmatprep.mubr.f32.mxu0 0.0
        %670 = vmatmul.mubr.f32.gmra.mrb[0].mxu0 %v586
        %v671 = vpop.f32.mrb[0].mxu0
        %v672 = vadd.f32 0.0, %v671
        %v673 = vpop.f32.mrb[0].mxu0
        %674 = vmatprep.mubr.f32.mxu0 0.0
        %675 = vmatmul.mubr.f32.gmra.mrb[0].mxu0 %v588
        %v676 = vpop.f32.mrb[0].mxu0
        %v677 = vadd.f32 0.0, %v676
        %v678 = vpop.f32.mrb[0].mxu0
        %679 = vmatprep.mubr.f32.mxu0 0.0
        %680 = vmatmul.mubr.f32.gmra.mrb[0].mxu0 %v590
        %v681 = vpop.f32.mrb[0].mxu0
        %v682 = vadd.f32 0.0, %v681
        %v683 = vpop.f32.mrb[0].mxu0
        %684 = vdwg.mxu0
        %689 = vrot.lane.b32.xlu0 %v434, 96
        %v690 = vpop.permute.xlu0 %689
        %691 = vrot.lane.b32.xlu0 %v439, 96
        %v692 = vpop.permute.xlu0 %691
        %693 = vrot.lane.b32.xlu0 %v444, 96
        %v694 = vpop.permute.xlu0 %693
        %695 = vrot.lane.b32.xlu0 %v449, 96
        %v696 = vpop.permute.xlu0 %695
        %v697 = vsel %vm250, %v434, 0
        %v699 = vsel %vm250, %v439, 0
        %v701 = vsel %vm250, %v444, 0
        %v703 = vsel %vm250, %v449, 0
        %v705 = vsel %vm250, %v690, 0
        %v707 = vsel %vm250, %v692, 0
        %v709 = vsel %vm250, %v694, 0
        %v711 = vsel %vm250, %v696, 0
        %713 = vmatprep.subr.mxu0 0.0
        %714 = vmatpush1.xpose.msra.mxu0 %v705
        %715 = vmatprep.subr.mxu0 0.0
        %716 = vmatpush1.xpose.msra.mxu0 %v707
        %717 = vmatprep.subr.mxu0 0.0
        %718 = vmatpush1.xpose.msra.mxu0 %v709
        %719 = vmatprep.subr.mxu0 0.0
        %720 = vmatpush1.xpose.msra.mxu0 %v711
        %721 = vmatprep.subr.mxu0 0.0
        %722 = vmatpush1.xpose.msra.mxu0 0.0
        %723 = vmatprep.subr.mxu0 0.0
        %724 = vmatpush1.xpose.msra.mxu0 0.0
        %725 = vmatprep.subr.mxu0 0.0
        %726 = vmatpush1.xpose.msra.mxu0 0.0
        %727 = vmatprep.subr.mxu0 0.0
        %728 = vmatpush1.xpose.msra.mxu0 0.0
        %729 = vmatprep.subr.mxu0 0.0
        %730 = vmatpush1.xpose.msra.mxu0 0.0
        %731 = vmatprep.subr.mxu0 0.0
        %732 = vmatpush1.xpose.msra.mxu0 0.0
        %733 = vmatprep.subr.mxu0 0.0
        %734 = vmatpush1.xpose.msra.mxu0 0.0
        %735 = vmatprep.subr.mxu0 0.0
        %736 = vmatpush1.xpose.msra.mxu0 0.0
        %737 = vmatprep.subr.mxu0 0.0
        %738 = vmatpush1.xpose.msra.mxu0 0.0
        %739 = vmatprep.subr.mxu0 0.0
        %740 = vmatpush1.xpose.msra.mxu0 0.0
        %741 = vmatprep.subr.mxu0 0.0
        %742 = vmatpush1.xpose.msra.mxu0 0.0
        %743 = vmatprep.subr.mxu0 0.0
        %744 = vmatpush1.xpose.msra.mxu0 0.0
        %745 = vmatprep.subr.mxu0 0.0
        %746 = vmatpush1.xpose.msra.mxu0 0.0
        %747 = vmatprep.subr.mxu0 0.0
        %748 = vmatpush1.xpose.msra.mxu0 0.0
        %749 = vmatprep.subr.mxu0 0.0
        %750 = vmatpush1.xpose.msra.mxu0 0.0
        %751 = vmatprep.subr.mxu0 0.0
        %752 = vmatpush1.xpose.msra.mxu0 0.0
        %753 = vmatprep.subr.mxu0 0.0
        %754 = vmatpush1.xpose.msra.mxu0 0.0
        %755 = vmatprep.subr.mxu0 0.0
        %756 = vmatpush1.xpose.msra.mxu0 0.0
        %757 = vmatprep.subr.mxu0 0.0
        %758 = vmatpush1.xpose.msra.mxu0 0.0
        %759 = vmatprep.subr.mxu0 0.0
        %760 = vmatpush1.xpose.msra.mxu0 0.0
        %761 = vmatprep.subr.mxu0 0.0
        %762 = vmatpush1.xpose.msra.mxu0 0.0
        %763 = vmatprep.subr.mxu0 0.0
        %764 = vmatpush1.xpose.msra.mxu0 0.0
        %765 = vmatprep.subr.mxu0 0.0
        %766 = vmatpush1.xpose.msra.mxu0 0.0
        %767 = vmatprep.subr.mxu0 0.0
        %768 = vmatpush1.xpose.msra.mxu0 0.0
        %769 = vmatprep.subr.mxu0 0.0
        %770 = vmatpush1.xpose.msra.mxu0 0.0
        %771 = vmatprep.subr.mxu0 0.0
        %772 = vmatpush1.xpose.msra.mxu0 0.0
        %773 = vmatprep.subr.mxu0 0.0
        %774 = vmatpush1.xpose.msra.mxu0 0.0
        %775 = vmatprep.subr.mxu0 0.0
        %776 = vmatpush1.xpose.msra.mxu0 0.0
        %777 = vmatprep.mubr.f32.mxu0 0.0
        %778 = vmatmul.mubr.f32.gmra.mrb[0].mxu0 %v697
        %v779 = vpop.f32.mrb[0].mxu0
        %v780 = vadd.f32 0.0, %v779
        %v781 = vpop.f32.mrb[0].mxu0
        %782 = vmatprep.mubr.f32.mxu0 0.0
        %783 = vmatmul.mubr.f32.gmra.mrb[0].mxu0 %v699
        %v784 = vpop.f32.mrb[0].mxu0
        %v785 = vadd.f32 0.0, %v784
        %v786 = vpop.f32.mrb[0].mxu0
        %787 = vmatprep.mubr.f32.mxu0 0.0
        %788 = vmatmul.mubr.f32.gmra.mrb[0].mxu0 %v701
        %v789 = vpop.f32.mrb[0].mxu0
        %v790 = vadd.f32 0.0, %v789
        %v791 = vpop.f32.mrb[0].mxu0
        %792 = vmatprep.mubr.f32.mxu0 0.0
        %793 = vmatmul.mubr.f32.gmra.mrb[0].mxu0 %v703
        %v794 = vpop.f32.mrb[0].mxu0
        %v795 = vadd.f32 0.0, %v794
        %v796 = vpop.f32.mrb[0].mxu0
        %797 = vdwg.mxu0
        %802 = vrot.lane.b32.xlu0 %v454, 96
        %v803 = vpop.permute.xlu0 %802
        %804 = vrot.lane.b32.xlu0 %v459, 96
        %v805 = vpop.permute.xlu0 %804
        %806 = vrot.lane.b32.xlu0 %v464, 96
        %v807 = vpop.permute.xlu0 %806
        %808 = vrot.lane.b32.xlu0 %v469, 96
        %v809 = vpop.permute.xlu0 %808
        %v810 = vsel %vm250, %v454, 0
        %v812 = vsel %vm250, %v459, 0
        %v814 = vsel %vm250, %v464, 0
        %v816 = vsel %vm250, %v469, 0
        %v818 = vsel %vm250, %v803, 0
        %v820 = vsel %vm250, %v805, 0
        %v822 = vsel %vm250, %v807, 0
        %v824 = vsel %vm250, %v809, 0
        %826 = vmatprep.subr.mxu0 0.0
        %827 = vmatpush1.xpose.msra.mxu0 %v818
        %828 = vmatprep.subr.mxu0 0.0
        %829 = vmatpush1.xpose.msra.mxu0 %v820
        %830 = vmatprep.subr.mxu0 0.0
        %831 = vmatpush1.xpose.msra.mxu0 %v822
        %832 = vmatprep.subr.mxu0 0.0
        %833 = vmatpush1.xpose.msra.mxu0 %v824
        %834 = vmatprep.subr.mxu0 0.0
        %835 = vmatpush1.xpose.msra.mxu0 0.0
        %836 = vmatprep.subr.mxu0 0.0
        %837 = vmatpush1.xpose.msra.mxu0 0.0
        %838 = vmatprep.subr.mxu0 0.0
        %839 = vmatpush1.xpose.msra.mxu0 0.0
        %840 = vmatprep.subr.mxu0 0.0
        %841 = vmatpush1.xpose.msra.mxu0 0.0
        %842 = vmatprep.subr.mxu0 0.0
        %843 = vmatpush1.xpose.msra.mxu0 0.0
        %844 = vmatprep.subr.mxu0 0.0
        %845 = vmatpush1.xpose.msra.mxu0 0.0
        %846 = vmatprep.subr.mxu0 0.0
        %847 = vmatpush1.xpose.msra.mxu0 0.0
        %848 = vmatprep.subr.mxu0 0.0
        %849 = vmatpush1.xpose.msra.mxu0 0.0
        %850 = vmatprep.subr.mxu0 0.0
        %851 = vmatpush1.xpose.msra.mxu0 0.0
        %852 = vmatprep.subr.mxu0 0.0
        %853 = vmatpush1.xpose.msra.mxu0 0.0
        %854 = vmatprep.subr.mxu0 0.0
        %855 = vmatpush1.xpose.msra.mxu0 0.0
        %856 = vmatprep.subr.mxu0 0.0
        %857 = vmatpush1.xpose.msra.mxu0 0.0
        %858 = vmatprep.subr.mxu0 0.0
        %859 = vmatpush1.xpose.msra.mxu0 0.0
        %860 = vmatprep.subr.mxu0 0.0
        %861 = vmatpush1.xpose.msra.mxu0 0.0
        %862 = vmatprep.subr.mxu0 0.0
        %863 = vmatpush1.xpose.msra.mxu0 0.0
        %864 = vmatprep.subr.mxu0 0.0
        %865 = vmatpush1.xpose.msra.mxu0 0.0
        %866 = vmatprep.subr.mxu0 0.0
        %867 = vmatpush1.xpose.msra.mxu0 0.0
        %868 = vmatprep.subr.mxu0 0.0
        %869 = vmatpush1.xpose.msra.mxu0 0.0
        %870 = vmatprep.subr.mxu0 0.0
        %871 = vmatpush1.xpose.msra.mxu0 0.0
        %872 = vmatprep.subr.mxu0 0.0
        %873 = vmatpush1.xpose.msra.mxu0 0.0
        %874 = vmatprep.subr.mxu0 0.0
        %875 = vmatpush1.xpose.msra.mxu0 0.0
        %876 = vmatprep.subr.mxu0 0.0
        %877 = vmatpush1.xpose.msra.mxu0 0.0
        %878 = vmatprep.subr.mxu0 0.0
        %879 = vmatpush1.xpose.msra.mxu0 0.0
        %880 = vmatprep.subr.mxu0 0.0
        %881 = vmatpush1.xpose.msra.mxu0 0.0
        %882 = vmatprep.subr.mxu0 0.0
        %883 = vmatpush1.xpose.msra.mxu0 0.0
        %884 = vmatprep.subr.mxu0 0.0
        %885 = vmatpush1.xpose.msra.mxu0 0.0
        %886 = vmatprep.subr.mxu0 0.0
        %887 = vmatpush1.xpose.msra.mxu0 0.0
        %888 = vmatprep.subr.mxu0 0.0
        %889 = vmatpush1.xpose.msra.mxu0 0.0
        %890 = vmatprep.mubr.f32.mxu0 0.0
        %891 = vmatmul.mubr.f32.gmra.mrb[0].mxu0 %v810
        %v892 = vpop.f32.mrb[0].mxu0
        %v893 = vadd.f32 0.0, %v892
        %v894 = vpop.f32.mrb[0].mxu0
        %895 = vmatprep.mubr.f32.mxu0 0.0
        %896 = vmatmul.mubr.f32.gmra.mrb[0].mxu0 %v812
        %v897 = vpop.f32.mrb[0].mxu0
        %v898 = vadd.f32 0.0, %v897
        %v899 = vpop.f32.mrb[0].mxu0
        %900 = vmatprep.mubr.f32.mxu0 0.0
        %901 = vmatmul.mubr.f32.gmra.mrb[0].mxu0 %v814
        %v902 = vpop.f32.mrb[0].mxu0
        %v903 = vadd.f32 0.0, %v902
        %v904 = vpop.f32.mrb[0].mxu0
        %905 = vmatprep.mubr.f32.mxu0 0.0
        %906 = vmatmul.mubr.f32.gmra.mrb[0].mxu0 %v816
        %v907 = vpop.f32.mrb[0].mxu0
        %v908 = vadd.f32 0.0, %v907
        %v909 = vpop.f32.mrb[0].mxu0
        %910 = vdwg.mxu0
        %915 = vrot.lane.b32.xlu0 %v474, 96
        %v916 = vpop.permute.xlu0 %915
        %917 = vrot.lane.b32.xlu0 %v479, 96
        %v918 = vpop.permute.xlu0 %917
        %919 = vrot.lane.b32.xlu0 %v484, 96
        %v920 = vpop.permute.xlu0 %919
        %921 = vrot.lane.b32.xlu0 %v489, 96
        %v922 = vpop.permute.xlu0 %921
        %v923 = vsel %vm250, %v474, 0
        %v925 = vsel %vm250, %v479, 0
        %v927 = vsel %vm250, %v484, 0
        %v929 = vsel %vm250, %v489, 0
        %v931 = vsel %vm250, %v916, 0
        %v933 = vsel %vm250, %v918, 0
        %v935 = vsel %vm250, %v920, 0
        %v937 = vsel %vm250, %v922, 0
        %939 = vmatprep.subr.mxu0 0.0
        %940 = vmatpush1.xpose.msra.mxu0 %v931
        %941 = vmatprep.subr.mxu0 0.0
        %942 = vmatpush1.xpose.msra.mxu0 %v933
        %943 = vmatprep.subr.mxu0 0.0
        %944 = vmatpush1.xpose.msra.mxu0 %v935
        %945 = vmatprep.subr.mxu0 0.0
        %946 = vmatpush1.xpose.msra.mxu0 %v937
        %947 = vmatprep.subr.mxu0 0.0
        %948 = vmatpush1.xpose.msra.mxu0 0.0
        %949 = vmatprep.subr.mxu0 0.0
        %950 = vmatpush1.xpose.msra.mxu0 0.0
        %951 = vmatprep.subr.mxu0 0.0
        %952 = vmatpush1.xpose.msra.mxu0 0.0
        %953 = vmatprep.subr.mxu0 0.0
        %954 = vmatpush1.xpose.msra.mxu0 0.0
        %955 = vmatprep.subr.mxu0 0.0
        %956 = vmatpush1.xpose.msra.mxu0 0.0
        %957 = vmatprep.subr.mxu0 0.0
        %958 = vmatpush1.xpose.msra.mxu0 0.0
        %959 = vmatprep.subr.mxu0 0.0
        %960 = vmatpush1.xpose.msra.mxu0 0.0
        %961 = vmatprep.subr.mxu0 0.0
        %962 = vmatpush1.xpose.msra.mxu0 0.0
        %963 = vmatprep.subr.mxu0 0.0
        %964 = vmatpush1.xpose.msra.mxu0 0.0
        %965 = vmatprep.subr.mxu0 0.0
        %966 = vmatpush1.xpose.msra.mxu0 0.0
        %967 = vmatprep.subr.mxu0 0.0
        %968 = vmatpush1.xpose.msra.mxu0 0.0
        %969 = vmatprep.subr.mxu0 0.0
        %970 = vmatpush1.xpose.msra.mxu0 0.0
        %971 = vmatprep.subr.mxu0 0.0
        %972 = vmatpush1.xpose.msra.mxu0 0.0
        %973 = vmatprep.subr.mxu0 0.0
        %974 = vmatpush1.xpose.msra.mxu0 0.0
        %975 = vmatprep.subr.mxu0 0.0
        %976 = vmatpush1.xpose.msra.mxu0 0.0
        %977 = vmatprep.subr.mxu0 0.0
        %978 = vmatpush1.xpose.msra.mxu0 0.0
        %979 = vmatprep.subr.mxu0 0.0
        %980 = vmatpush1.xpose.msra.mxu0 0.0
        %981 = vmatprep.subr.mxu0 0.0
        %982 = vmatpush1.xpose.msra.mxu0 0.0
        %983 = vmatprep.subr.mxu0 0.0
        %984 = vmatpush1.xpose.msra.mxu0 0.0
        %985 = vmatprep.subr.mxu0 0.0
        %986 = vmatpush1.xpose.msra.mxu0 0.0
        %987 = vmatprep.subr.mxu0 0.0
        %988 = vmatpush1.xpose.msra.mxu0 0.0
        %989 = vmatprep.subr.mxu0 0.0
        %990 = vmatpush1.xpose.msra.mxu0 0.0
        %991 = vmatprep.subr.mxu0 0.0
        %992 = vmatpush1.xpose.msra.mxu0 0.0
        %993 = vmatprep.subr.mxu0 0.0
        %994 = vmatpush1.xpose.msra.mxu0 0.0
        %995 = vmatprep.subr.mxu0 0.0
        %996 = vmatpush1.xpose.msra.mxu0 0.0
        %997 = vmatprep.subr.mxu0 0.0
        %998 = vmatpush1.xpose.msra.mxu0 0.0
        %999 = vmatprep.subr.mxu0 0.0
        %1000 = vmatpush1.xpose.msra.mxu0 0.0
        %1001 = vmatprep.subr.mxu0 0.0
        %1002 = vmatpush1.xpose.msra.mxu0 0.0
        %1003 = vmatprep.mubr.f32.mxu0 0.0
        %1004 = vmatmul.mubr.f32.gmra.mrb[0].mxu0 %v923
        %v1005 = vpop.f32.mrb[0].mxu0
        %v1006 = vadd.f32 0.0, %v1005
        %v1007 = vpop.f32.mrb[0].mxu0
        %1008 = vmatprep.mubr.f32.mxu0 0.0
        %1009 = vmatmul.mubr.f32.gmra.mrb[0].mxu0 %v925
        %v1010 = vpop.f32.mrb[0].mxu0
        %v1011 = vadd.f32 0.0, %v1010
        %v1012 = vpop.f32.mrb[0].mxu0
        %1013 = vmatprep.mubr.f32.mxu0 0.0
        %1014 = vmatmul.mubr.f32.gmra.mrb[0].mxu0 %v927
        %v1015 = vpop.f32.mrb[0].mxu0
        %v1016 = vadd.f32 0.0, %v1015
        %v1017 = vpop.f32.mrb[0].mxu0
        %1018 = vmatprep.mubr.f32.mxu0 0.0
        %1019 = vmatmul.mubr.f32.gmra.mrb[0].mxu0 %v929
        %v1020 = vpop.f32.mrb[0].mxu0
        %v1021 = vadd.f32 0.0, %v1020
        %v1022 = vpop.f32.mrb[0].mxu0
        %1023 = vdwg.mxu0
        %1028 = vrot.lane.b32.xlu0 %v494, 96
        %v1029 = vpop.permute.xlu0 %1028
        %1030 = vrot.lane.b32.xlu0 %v499, 96
        %v1031 = vpop.permute.xlu0 %1030
        %1032 = vrot.lane.b32.xlu0 %v504, 96
        %v1033 = vpop.permute.xlu0 %1032
        %1034 = vrot.lane.b32.xlu0 %v509, 96
        %v1035 = vpop.permute.xlu0 %1034
        %v1036 = vsel %vm250, %v494, 0
        %v1038 = vsel %vm250, %v499, 0
        %v1040 = vsel %vm250, %v504, 0
        %v1042 = vsel %vm250, %v509, 0
        %v1044 = vsel %vm250, %v1029, 0
        %v1046 = vsel %vm250, %v1031, 0
        %v1048 = vsel %vm250, %v1033, 0
        %v1050 = vsel %vm250, %v1035, 0
        %1052 = vmatprep.subr.mxu0 0.0
        %1053 = vmatpush1.xpose.msra.mxu0 %v1044
        %1054 = vmatprep.subr.mxu0 0.0
        %1055 = vmatpush1.xpose.msra.mxu0 %v1046
        %1056 = vmatprep.subr.mxu0 0.0
        %1057 = vmatpush1.xpose.msra.mxu0 %v1048
        %1058 = vmatprep.subr.mxu0 0.0
        %1059 = vmatpush1.xpose.msra.mxu0 %v1050
        %1060 = vmatprep.subr.mxu0 0.0
        %1061 = vmatpush1.xpose.msra.mxu0 0.0
        %1062 = vmatprep.subr.mxu0 0.0
        %1063 = vmatpush1.xpose.msra.mxu0 0.0
        %1064 = vmatprep.subr.mxu0 0.0
        %1065 = vmatpush1.xpose.msra.mxu0 0.0
        %1066 = vmatprep.subr.mxu0 0.0
        %1067 = vmatpush1.xpose.msra.mxu0 0.0
        %1068 = vmatprep.subr.mxu0 0.0
        %1069 = vmatpush1.xpose.msra.mxu0 0.0
        %1070 = vmatprep.subr.mxu0 0.0
        %1071 = vmatpush1.xpose.msra.mxu0 0.0
        %1072 = vmatprep.subr.mxu0 0.0
        %1073 = vmatpush1.xpose.msra.mxu0 0.0
        %1074 = vmatprep.subr.mxu0 0.0
        %1075 = vmatpush1.xpose.msra.mxu0 0.0
        %1076 = vmatprep.subr.mxu0 0.0
        %1077 = vmatpush1.xpose.msra.mxu0 0.0
        %1078 = vmatprep.subr.mxu0 0.0
        %1079 = vmatpush1.xpose.msra.mxu0 0.0
        %1080 = vmatprep.subr.mxu0 0.0
        %1081 = vmatpush1.xpose.msra.mxu0 0.0
        %1082 = vmatprep.subr.mxu0 0.0
        %1083 = vmatpush1.xpose.msra.mxu0 0.0
        %1084 = vmatprep.subr.mxu0 0.0
        %1085 = vmatpush1.xpose.msra.mxu0 0.0
        %1086 = vmatprep.subr.mxu0 0.0
        %1087 = vmatpush1.xpose.msra.mxu0 0.0
        %1088 = vmatprep.subr.mxu0 0.0
        %1089 = vmatpush1.xpose.msra.mxu0 0.0
        %1090 = vmatprep.subr.mxu0 0.0
        %1091 = vmatpush1.xpose.msra.mxu0 0.0
        %1092 = vmatprep.subr.mxu0 0.0
        %1093 = vmatpush1.xpose.msra.mxu0 0.0
        %1094 = vmatprep.subr.mxu0 0.0
        %1095 = vmatpush1.xpose.msra.mxu0 0.0
        %1096 = vmatprep.subr.mxu0 0.0
        %1097 = vmatpush1.xpose.msra.mxu0 0.0
        %1098 = vmatprep.subr.mxu0 0.0
        %1099 = vmatpush1.xpose.msra.mxu0 0.0
        %1100 = vmatprep.subr.mxu0 0.0
        %1101 = vmatpush1.xpose.msra.mxu0 0.0
        %1102 = vmatprep.subr.mxu0 0.0
        %1103 = vmatpush1.xpose.msra.mxu0 0.0
        %1104 = vmatprep.subr.mxu0 0.0
        %1105 = vmatpush1.xpose.msra.mxu0 0.0
        %1106 = vmatprep.subr.mxu0 0.0
        %1107 = vmatpush1.xpose.msra.mxu0 0.0
        %1108 = vmatprep.subr.mxu0 0.0
        %1109 = vmatpush1.xpose.msra.mxu0 0.0
        %1110 = vmatprep.subr.mxu0 0.0
        %1111 = vmatpush1.xpose.msra.mxu0 0.0
        %1112 = vmatprep.subr.mxu0 0.0
        %1113 = vmatpush1.xpose.msra.mxu0 0.0
        %1114 = vmatprep.subr.mxu0 0.0
        %1115 = vmatpush1.xpose.msra.mxu0 0.0
        %1116 = vmatprep.mubr.f32.mxu0 0.0
        %1117 = vmatmul.mubr.f32.gmra.mrb[0].mxu0 %v1036
        %v1118 = vpop.f32.mrb[0].mxu0
        %v1119 = vadd.f32 0.0, %v1118
        %v1120 = vpop.f32.mrb[0].mxu0
        %1121 = vmatprep.mubr.f32.mxu0 0.0
        %1122 = vmatmul.mubr.f32.gmra.mrb[0].mxu0 %v1038
        %v1123 = vpop.f32.mrb[0].mxu0
        %v1124 = vadd.f32 0.0, %v1123
        %v1125 = vpop.f32.mrb[0].mxu0
        %1126 = vmatprep.mubr.f32.mxu0 0.0
        %1127 = vmatmul.mubr.f32.gmra.mrb[0].mxu0 %v1040
        %v1128 = vpop.f32.mrb[0].mxu0
        %v1129 = vadd.f32 0.0, %v1128
        %v1130 = vpop.f32.mrb[0].mxu0
        %1131 = vmatprep.mubr.f32.mxu0 0.0
        %1132 = vmatmul.mubr.f32.gmra.mrb[0].mxu0 %v1042
        %v1133 = vpop.f32.mrb[0].mxu0
        %v1134 = vadd.f32 0.0, %v1133
        %v1135 = vpop.f32.mrb[0].mxu0
        %1136 = vdwg.mxu0
        %1141 = vrot.lane.b32.xlu0 %v514, 96
        %v1142 = vpop.permute.xlu0 %1141
        %1143 = vrot.lane.b32.xlu0 %v519, 96
        %v1144 = vpop.permute.xlu0 %1143
        %1145 = vrot.lane.b32.xlu0 %v524, 96
        %v1146 = vpop.permute.xlu0 %1145
        %1147 = vrot.lane.b32.xlu0 %v529, 96
        %v1148 = vpop.permute.xlu0 %1147
        %v1149 = vsel %vm250, %v514, 0
        %v1151 = vsel %vm250, %v519, 0
        %v1153 = vsel %vm250, %v524, 0
        %v1155 = vsel %vm250, %v529, 0
        %v1157 = vsel %vm250, %v1142, 0
        %v1159 = vsel %vm250, %v1144, 0
        %v1161 = vsel %vm250, %v1146, 0
        %v1163 = vsel %vm250, %v1148, 0
        %1165 = vmatprep.subr.mxu0 0.0
        %1166 = vmatpush1.xpose.msra.mxu0 %v1157
        %1167 = vmatprep.subr.mxu0 0.0
        %1168 = vmatpush1.xpose.msra.mxu0 %v1159
        %1169 = vmatprep.subr.mxu0 0.0
        %1170 = vmatpush1.xpose.msra.mxu0 %v1161
        %1171 = vmatprep.subr.mxu0 0.0
        %1172 = vmatpush1.xpose.msra.mxu0 %v1163
        %1173 = vmatprep.subr.mxu0 0.0
        %1174 = vmatpush1.xpose.msra.mxu0 0.0
        %1175 = vmatprep.subr.mxu0 0.0
        %1176 = vmatpush1.xpose.msra.mxu0 0.0
        %1177 = vmatprep.subr.mxu0 0.0
        %1178 = vmatpush1.xpose.msra.mxu0 0.0
        %1179 = vmatprep.subr.mxu0 0.0
        %1180 = vmatpush1.xpose.msra.mxu0 0.0
        %1181 = vmatprep.subr.mxu0 0.0
        %1182 = vmatpush1.xpose.msra.mxu0 0.0
        %1183 = vmatprep.subr.mxu0 0.0
        %1184 = vmatpush1.xpose.msra.mxu0 0.0
        %1185 = vmatprep.subr.mxu0 0.0
        %1186 = vmatpush1.xpose.msra.mxu0 0.0
        %1187 = vmatprep.subr.mxu0 0.0
        %1188 = vmatpush1.xpose.msra.mxu0 0.0
        %1189 = vmatprep.subr.mxu0 0.0
        %1190 = vmatpush1.xpose.msra.mxu0 0.0
        %1191 = vmatprep.subr.mxu0 0.0
        %1192 = vmatpush1.xpose.msra.mxu0 0.0
        %1193 = vmatprep.subr.mxu0 0.0
        %1194 = vmatpush1.xpose.msra.mxu0 0.0
        %1195 = vmatprep.subr.mxu0 0.0
        %1196 = vmatpush1.xpose.msra.mxu0 0.0
        %1197 = vmatprep.subr.mxu0 0.0
        %1198 = vmatpush1.xpose.msra.mxu0 0.0
        %1199 = vmatprep.subr.mxu0 0.0
        %1200 = vmatpush1.xpose.msra.mxu0 0.0
        %1201 = vmatprep.subr.mxu0 0.0
        %1202 = vmatpush1.xpose.msra.mxu0 0.0
        %1203 = vmatprep.subr.mxu0 0.0
        %1204 = vmatpush1.xpose.msra.mxu0 0.0
        %1205 = vmatprep.subr.mxu0 0.0
        %1206 = vmatpush1.xpose.msra.mxu0 0.0
        %1207 = vmatprep.subr.mxu0 0.0
        %1208 = vmatpush1.xpose.msra.mxu0 0.0
        %1209 = vmatprep.subr.mxu0 0.0
        %1210 = vmatpush1.xpose.msra.mxu0 0.0
        %1211 = vmatprep.subr.mxu0 0.0
        %1212 = vmatpush1.xpose.msra.mxu0 0.0
        %1213 = vmatprep.subr.mxu0 0.0
        %1214 = vmatpush1.xpose.msra.mxu0 0.0
        %1215 = vmatprep.subr.mxu0 0.0
        %1216 = vmatpush1.xpose.msra.mxu0 0.0
        %1217 = vmatprep.subr.mxu0 0.0
        %1218 = vmatpush1.xpose.msra.mxu0 0.0
        %1219 = vmatprep.subr.mxu0 0.0
        %1220 = vmatpush1.xpose.msra.mxu0 0.0
        %1221 = vmatprep.subr.mxu0 0.0
        %1222 = vmatpush1.xpose.msra.mxu0 0.0
        %1223 = vmatprep.subr.mxu0 0.0
        %1224 = vmatpush1.xpose.msra.mxu0 0.0
        %1225 = vmatprep.subr.mxu0 0.0
        %1226 = vmatpush1.xpose.msra.mxu0 0.0
        %1227 = vmatprep.subr.mxu0 0.0
        %1228 = vmatpush1.xpose.msra.mxu0 0.0
        %1229 = vmatprep.mubr.f32.mxu0 0.0
        %1230 = vmatmul.mubr.f32.gmra.mrb[0].mxu0 %v1149
        %v1231 = vpop.f32.mrb[0].mxu0
        %v1232 = vadd.f32 0.0, %v1231
        %v1233 = vpop.f32.mrb[0].mxu0
        %1234 = vmatprep.mubr.f32.mxu0 0.0
        %1235 = vmatmul.mubr.f32.gmra.mrb[0].mxu0 %v1151
        %v1236 = vpop.f32.mrb[0].mxu0
        %v1237 = vadd.f32 0.0, %v1236
        %v1238 = vpop.f32.mrb[0].mxu0
        %1239 = vmatprep.mubr.f32.mxu0 0.0
        %1240 = vmatmul.mubr.f32.gmra.mrb[0].mxu0 %v1153
        %v1241 = vpop.f32.mrb[0].mxu0
        %v1242 = vadd.f32 0.0, %v1241
        %v1243 = vpop.f32.mrb[0].mxu0
        %1244 = vmatprep.mubr.f32.mxu0 0.0
        %1245 = vmatmul.mubr.f32.gmra.mrb[0].mxu0 %v1155
        %v1246 = vpop.f32.mrb[0].mxu0
        %v1247 = vadd.f32 0.0, %v1246
        %v1248 = vpop.f32.mrb[0].mxu0
        %1249 = vdwg.mxu0
        %1254 = vrot.lane.b32.xlu0 %v534, 96
        %v1255 = vpop.permute.xlu0 %1254
        %1256 = vrot.lane.b32.xlu0 %v539, 96
        %v1257 = vpop.permute.xlu0 %1256
        %1258 = vrot.lane.b32.xlu0 %v544, 96
        %v1259 = vpop.permute.xlu0 %1258
        %1260 = vrot.lane.b32.xlu0 %v549, 96
        %v1261 = vpop.permute.xlu0 %1260
        %v1262 = vsel %vm250, %v534, 0
        %v1264 = vsel %vm250, %v539, 0
        %v1266 = vsel %vm250, %v544, 0
        %v1268 = vsel %vm250, %v549, 0
        %v1270 = vsel %vm250, %v1255, 0
        %v1272 = vsel %vm250, %v1257, 0
        %v1274 = vsel %vm250, %v1259, 0
        %v1276 = vsel %vm250, %v1261, 0
        %1278 = vmatprep.subr.mxu0 0.0
        %1279 = vmatpush1.xpose.msra.mxu0 %v1270
        %1280 = vmatprep.subr.mxu0 0.0
        %1281 = vmatpush1.xpose.msra.mxu0 %v1272
        %1282 = vmatprep.subr.mxu0 0.0
        %1283 = vmatpush1.xpose.msra.mxu0 %v1274
        %1284 = vmatprep.subr.mxu0 0.0
        %1285 = vmatpush1.xpose.msra.mxu0 %v1276
        %1286 = vmatprep.subr.mxu0 0.0
        %1287 = vmatpush1.xpose.msra.mxu0 0.0
        %1288 = vmatprep.subr.mxu0 0.0
        %1289 = vmatpush1.xpose.msra.mxu0 0.0
        %1290 = vmatprep.subr.mxu0 0.0
        %1291 = vmatpush1.xpose.msra.mxu0 0.0
        %1292 = vmatprep.subr.mxu0 0.0
        %1293 = vmatpush1.xpose.msra.mxu0 0.0
        %1294 = vmatprep.subr.mxu0 0.0
        %1295 = vmatpush1.xpose.msra.mxu0 0.0
        %1296 = vmatprep.subr.mxu0 0.0
        %1297 = vmatpush1.xpose.msra.mxu0 0.0
        %1298 = vmatprep.subr.mxu0 0.0
        %1299 = vmatpush1.xpose.msra.mxu0 0.0
        %1300 = vmatprep.subr.mxu0 0.0
        %1301 = vmatpush1.xpose.msra.mxu0 0.0
        %1302 = vmatprep.subr.mxu0 0.0
        %1303 = vmatpush1.xpose.msra.mxu0 0.0
        %1304 = vmatprep.subr.mxu0 0.0
        %1305 = vmatpush1.xpose.msra.mxu0 0.0
        %1306 = vmatprep.subr.mxu0 0.0
        %1307 = vmatpush1.xpose.msra.mxu0 0.0
        %1308 = vmatprep.subr.mxu0 0.0
        %1309 = vmatpush1.xpose.msra.mxu0 0.0
        %1310 = vmatprep.subr.mxu0 0.0
        %1311 = vmatpush1.xpose.msra.mxu0 0.0
        %1312 = vmatprep.subr.mxu0 0.0
        %1313 = vmatpush1.xpose.msra.mxu0 0.0
        %1314 = vmatprep.subr.mxu0 0.0
        %1315 = vmatpush1.xpose.msra.mxu0 0.0
        %1316 = vmatprep.subr.mxu0 0.0
        %1317 = vmatpush1.xpose.msra.mxu0 0.0
        %1318 = vmatprep.subr.mxu0 0.0
        %1319 = vmatpush1.xpose.msra.mxu0 0.0
        %1320 = vmatprep.subr.mxu0 0.0
        %1321 = vmatpush1.xpose.msra.mxu0 0.0
        %1322 = vmatprep.subr.mxu0 0.0
        %1323 = vmatpush1.xpose.msra.mxu0 0.0
        %1324 = vmatprep.subr.mxu0 0.0
        %1325 = vmatpush1.xpose.msra.mxu0 0.0
        %1326 = vmatprep.subr.mxu0 0.0
        %1327 = vmatpush1.xpose.msra.mxu0 0.0
        %1328 = vmatprep.subr.mxu0 0.0
        %1329 = vmatpush1.xpose.msra.mxu0 0.0
        %1330 = vmatprep.subr.mxu0 0.0
        %1331 = vmatpush1.xpose.msra.mxu0 0.0
        %1332 = vmatprep.subr.mxu0 0.0
        %1333 = vmatpush1.xpose.msra.mxu0 0.0
        %1334 = vmatprep.subr.mxu0 0.0
        %1335 = vmatpush1.xpose.msra.mxu0 0.0
        %1336 = vmatprep.subr.mxu0 0.0
        %1337 = vmatpush1.xpose.msra.mxu0 0.0
        %1338 = vmatprep.subr.mxu0 0.0
        %1339 = vmatpush1.xpose.msra.mxu0 0.0
        %1340 = vmatprep.subr.mxu0 0.0
        %1341 = vmatpush1.xpose.msra.mxu0 0.0
        %1342 = vmatprep.mubr.f32.mxu0 0.0
        %1343 = vmatmul.mubr.f32.gmra.mrb[0].mxu0 %v1262
        %v1344 = vpop.f32.mrb[0].mxu0
        %v1345 = vadd.f32 0.0, %v1344
        %v1346 = vpop.f32.mrb[0].mxu0
        %1347 = vmatprep.mubr.f32.mxu0 0.0
        %1348 = vmatmul.mubr.f32.gmra.mrb[0].mxu0 %v1264
        %v1349 = vpop.f32.mrb[0].mxu0
        %v1350 = vadd.f32 0.0, %v1349
        %v1351 = vpop.f32.mrb[0].mxu0
        %1352 = vmatprep.mubr.f32.mxu0 0.0
        %1353 = vmatmul.mubr.f32.gmra.mrb[0].mxu0 %v1266
        %v1354 = vpop.f32.mrb[0].mxu0
        %v1355 = vadd.f32 0.0, %v1354
        %v1356 = vpop.f32.mrb[0].mxu0
        %1357 = vmatprep.mubr.f32.mxu0 0.0
        %1358 = vmatmul.mubr.f32.gmra.mrb[0].mxu0 %v1268
        %v1359 = vpop.f32.mrb[0].mxu0
        %v1360 = vadd.f32 0.0, %v1359
        %v1361 = vpop.f32.mrb[0].mxu0
        %1362 = vdwg.mxu0
        %1367 = vrot.lane.b32.xlu0 %v554, 96
        %v1368 = vpop.permute.xlu0 %1367
        %1369 = vrot.lane.b32.xlu0 %v559, 96
        %v1370 = vpop.permute.xlu0 %1369
        %1371 = vrot.lane.b32.xlu0 %v564, 96
        %v1372 = vpop.permute.xlu0 %1371
        %1373 = vrot.lane.b32.xlu0 %v569, 96
        %v1374 = vpop.permute.xlu0 %1373
        %v1375 = vsel %vm250, %v554, 0
        %v1377 = vsel %vm250, %v559, 0
        %v1379 = vsel %vm250, %v564, 0
        %v1381 = vsel %vm250, %v569, 0
        %v1383 = vsel %vm250, %v1368, 0
        %v1385 = vsel %vm250, %v1370, 0
        %v1387 = vsel %vm250, %v1372, 0
        %v1389 = vsel %vm250, %v1374, 0
        %1391 = vmatprep.subr.mxu0 0.0
        %1392 = vmatpush1.xpose.msra.mxu0 %v1383
        %1393 = vmatprep.subr.mxu0 0.0
        %1394 = vmatpush1.xpose.msra.mxu0 %v1385
        %1395 = vmatprep.subr.mxu0 0.0
        %1396 = vmatpush1.xpose.msra.mxu0 %v1387
        %1397 = vmatprep.subr.mxu0 0.0
        %1398 = vmatpush1.xpose.msra.mxu0 %v1389
        %1399 = vmatprep.subr.mxu0 0.0
        %1400 = vmatpush1.xpose.msra.mxu0 0.0
        %1401 = vmatprep.subr.mxu0 0.0
        %1402 = vmatpush1.xpose.msra.mxu0 0.0
        %1403 = vmatprep.subr.mxu0 0.0
        %1404 = vmatpush1.xpose.msra.mxu0 0.0
        %1405 = vmatprep.subr.mxu0 0.0
        %1406 = vmatpush1.xpose.msra.mxu0 0.0
        %1407 = vmatprep.subr.mxu0 0.0
        %1408 = vmatpush1.xpose.msra.mxu0 0.0
        %1409 = vmatprep.subr.mxu0 0.0
        %1410 = vmatpush1.xpose.msra.mxu0 0.0
        %1411 = vmatprep.subr.mxu0 0.0
        %1412 = vmatpush1.xpose.msra.mxu0 0.0
        %1413 = vmatprep.subr.mxu0 0.0
        %1414 = vmatpush1.xpose.msra.mxu0 0.0
        %1415 = vmatprep.subr.mxu0 0.0
        %1416 = vmatpush1.xpose.msra.mxu0 0.0
        %1417 = vmatprep.subr.mxu0 0.0
        %1418 = vmatpush1.xpose.msra.mxu0 0.0
        %1419 = vmatprep.subr.mxu0 0.0
        %1420 = vmatpush1.xpose.msra.mxu0 0.0
        %1421 = vmatprep.subr.mxu0 0.0
        %1422 = vmatpush1.xpose.msra.mxu0 0.0
        %1423 = vmatprep.subr.mxu0 0.0
        %1424 = vmatpush1.xpose.msra.mxu0 0.0
        %1425 = vmatprep.subr.mxu0 0.0
        %1426 = vmatpush1.xpose.msra.mxu0 0.0
        %1427 = vmatprep.subr.mxu0 0.0
        %1428 = vmatpush1.xpose.msra.mxu0 0.0
        %1429 = vmatprep.subr.mxu0 0.0
        %1430 = vmatpush1.xpose.msra.mxu0 0.0
        %1431 = vmatprep.subr.mxu0 0.0
        %1432 = vmatpush1.xpose.msra.mxu0 0.0
        %1433 = vmatprep.subr.mxu0 0.0
        %1434 = vmatpush1.xpose.msra.mxu0 0.0
        %1435 = vmatprep.subr.mxu0 0.0
        %1436 = vmatpush1.xpose.msra.mxu0 0.0
        %1437 = vmatprep.subr.mxu0 0.0
        %1438 = vmatpush1.xpose.msra.mxu0 0.0
        %1439 = vmatprep.subr.mxu0 0.0
        %1440 = vmatpush1.xpose.msra.mxu0 0.0
        %1441 = vmatprep.subr.mxu0 0.0
        %1442 = vmatpush1.xpose.msra.mxu0 0.0
        %1443 = vmatprep.subr.mxu0 0.0
        %1444 = vmatpush1.xpose.msra.mxu0 0.0
        %1445 = vmatprep.subr.mxu0 0.0
        %1446 = vmatpush1.xpose.msra.mxu0 0.0
        %1447 = vmatprep.subr.mxu0 0.0
        %1448 = vmatpush1.xpose.msra.mxu0 0.0
        %1449 = vmatprep.subr.mxu0 0.0
        %1450 = vmatpush1.xpose.msra.mxu0 0.0
        %1451 = vmatprep.subr.mxu0 0.0
        %1452 = vmatpush1.xpose.msra.mxu0 0.0
        %1453 = vmatprep.subr.mxu0 0.0
        %1454 = vmatpush1.xpose.msra.mxu0 0.0
        %1455 = vmatprep.mubr.f32.mxu0 0.0
        %1456 = vmatmul.mubr.f32.gmra.mrb[0].mxu0 %v1375
        %v1457 = vpop.f32.mrb[0].mxu0
        %v1458 = vadd.f32 0.0, %v1457
        %v1459 = vpop.f32.mrb[0].mxu0
        %1460 = vmatprep.mubr.f32.mxu0 0.0
        %1461 = vmatmul.mubr.f32.gmra.mrb[0].mxu0 %v1377
        %v1462 = vpop.f32.mrb[0].mxu0
        %v1463 = vadd.f32 0.0, %v1462
        %v1464 = vpop.f32.mrb[0].mxu0
        %1465 = vmatprep.mubr.f32.mxu0 0.0
        %1466 = vmatmul.mubr.f32.gmra.mrb[0].mxu0 %v1379
        %v1467 = vpop.f32.mrb[0].mxu0
        %v1468 = vadd.f32 0.0, %v1467
        %v1469 = vpop.f32.mrb[0].mxu0
        %1470 = vmatprep.mubr.f32.mxu0 0.0
        %1471 = vmatmul.mubr.f32.gmra.mrb[0].mxu0 %v1381
        %v1472 = vpop.f32.mrb[0].mxu0
        %v1473 = vadd.f32 0.0, %v1472
        %v1474 = vpop.f32.mrb[0].mxu0
        %1475 = vdwg.mxu0
        %v1476 = vmul.f32 %v667, 0.17677669
        %v1477 = vmul.f32 %v672, 0.17677669
        %v1478 = vmul.f32 %v677, 0.17677669
        %v1479 = vmul.f32 %v682, 0.17677669
        %v1480 = vmul.f32 %v780, 0.17677669
        %v1481 = vmul.f32 %v785, 0.17677669
        %v1482 = vmul.f32 %v790, 0.17677669
        %v1483 = vmul.f32 %v795, 0.17677669
        %v1484 = vmul.f32 %v893, 0.17677669
        %v1485 = vmul.f32 %v898, 0.17677669
        %v1486 = vmul.f32 %v903, 0.17677669
        %v1487 = vmul.f32 %v908, 0.17677669
        %v1488 = vmul.f32 %v1006, 0.17677669
        %v1489 = vmul.f32 %v1011, 0.17677669
        %v1490 = vmul.f32 %v1016, 0.17677669
        %v1491 = vmul.f32 %v1021, 0.17677669
        %v1492 = vmul.f32 %v1119, 0.17677669
        %v1493 = vmul.f32 %v1124, 0.17677669
        %v1494 = vmul.f32 %v1129, 0.17677669
        %v1495 = vmul.f32 %v1134, 0.17677669
        %v1496 = vmul.f32 %v1232, 0.17677669
        %v1497 = vmul.f32 %v1237, 0.17677669
        %v1498 = vmul.f32 %v1242, 0.17677669
        %v1499 = vmul.f32 %v1247, 0.17677669
        %v1500 = vmul.f32 %v1345, 0.17677669
        %v1501 = vmul.f32 %v1350, 0.17677669
        %v1502 = vmul.f32 %v1355, 0.17677669
        %v1503 = vmul.f32 %v1360, 0.17677669
        %v1504 = vmul.f32 %v1458, 0.17677669
        %v1505 = vmul.f32 %v1463, 0.17677669
        %v1506 = vmul.f32 %v1468, 0.17677669
        %v1507 = vmul.f32 %v1473, 0.17677669
        %v1508 = vsel %vm250, %v1476, -inf
        %1509 = vmax.xlane.f32.xlu0 %v1508
        %v1510 = vpop.xlane.xlu0 %1509
        %v1511 = vsel %vm250, %v1477, -inf
        %1512 = vmax.xlane.f32.xlu0 %v1511
        %v1513 = vpop.xlane.xlu0 %1512
        %v1514 = vsel %vm250, %v1478, -inf
        %1515 = vmax.xlane.f32.xlu0 %v1514
        %v1516 = vpop.xlane.xlu0 %1515
        %v1517 = vsel %vm250, %v1479, -inf
        %1518 = vmax.xlane.f32.xlu0 %v1517
        %v1519 = vpop.xlane.xlu0 %1518
        %v1520 = vsel %vm250, %v1480, -inf
        %1521 = vmax.xlane.f32.xlu0 %v1520
        %v1522 = vpop.xlane.xlu0 %1521
        %v1523 = vsel %vm250, %v1481, -inf
        %1524 = vmax.xlane.f32.xlu0 %v1523
        %v1525 = vpop.xlane.xlu0 %1524
        %v1526 = vsel %vm250, %v1482, -inf
        %1527 = vmax.xlane.f32.xlu0 %v1526
        %v1528 = vpop.xlane.xlu0 %1527
        %v1529 = vsel %vm250, %v1483, -inf
        %1530 = vmax.xlane.f32.xlu0 %v1529
        %v1531 = vpop.xlane.xlu0 %1530
        %v1532 = vsel %vm250, %v1484, -inf
        %1533 = vmax.xlane.f32.xlu0 %v1532
        %v1534 = vpop.xlane.xlu0 %1533
        %v1535 = vsel %vm250, %v1485, -inf
        %1536 = vmax.xlane.f32.xlu0 %v1535
        %v1537 = vpop.xlane.xlu0 %1536
        %v1538 = vsel %vm250, %v1486, -inf
        %1539 = vmax.xlane.f32.xlu0 %v1538
        %v1540 = vpop.xlane.xlu0 %1539
        %v1541 = vsel %vm250, %v1487, -inf
        %1542 = vmax.xlane.f32.xlu0 %v1541
        %v1543 = vpop.xlane.xlu0 %1542
        %v1544 = vsel %vm250, %v1488, -inf
        %1545 = vmax.xlane.f32.xlu0 %v1544
        %v1546 = vpop.xlane.xlu0 %1545
        %v1547 = vsel %vm250, %v1489, -inf
        %1548 = vmax.xlane.f32.xlu0 %v1547
        %v1549 = vpop.xlane.xlu0 %1548
        %v1550 = vsel %vm250, %v1490, -inf
        %1551 = vmax.xlane.f32.xlu0 %v1550
        %v1552 = vpop.xlane.xlu0 %1551
        %v1553 = vsel %vm250, %v1491, -inf
        %1554 = vmax.xlane.f32.xlu0 %v1553
        %v1555 = vpop.xlane.xlu0 %1554
        %v1556 = vsel %vm250, %v1492, -inf
        %1557 = vmax.xlane.f32.xlu0 %v1556
        %v1558 = vpop.xlane.xlu0 %1557
        %v1559 = vsel %vm250, %v1493, -inf
        %1560 = vmax.xlane.f32.xlu0 %v1559
        %v1561 = vpop.xlane.xlu0 %1560
        %v1562 = vsel %vm250, %v1494, -inf
        %1563 = vmax.xlane.f32.xlu0 %v1562
        %v1564 = vpop.xlane.xlu0 %1563
        %v1565 = vsel %vm250, %v1495, -inf
        %1566 = vmax.xlane.f32.xlu0 %v1565
        %v1567 = vpop.xlane.xlu0 %1566
        %v1568 = vsel %vm250, %v1496, -inf
        %1569 = vmax.xlane.f32.xlu0 %v1568
        %v1570 = vpop.xlane.xlu0 %1569
        %v1571 = vsel %vm250, %v1497, -inf
        %1572 = vmax.xlane.f32.xlu0 %v1571
        %v1573 = vpop.xlane.xlu0 %1572
        %v1574 = vsel %vm250, %v1498, -inf
        %1575 = vmax.xlane.f32.xlu0 %v1574
        %v1576 = vpop.xlane.xlu0 %1575
        %v1577 = vsel %vm250, %v1499, -inf
        %1578 = vmax.xlane.f32.xlu0 %v1577
        %v1579 = vpop.xlane.xlu0 %1578
        %v1580 = vsel %vm250, %v1500, -inf
        %1581 = vmax.xlane.f32.xlu0 %v1580
        %v1582 = vpop.xlane.xlu0 %1581
        %v1583 = vsel %vm250, %v1501, -inf
        %1584 = vmax.xlane.f32.xlu0 %v1583
        %v1585 = vpop.xlane.xlu0 %1584
        %v1586 = vsel %vm250, %v1502, -inf
        %1587 = vmax.xlane.f32.xlu0 %v1586
        %v1588 = vpop.xlane.xlu0 %1587
        %v1589 = vsel %vm250, %v1503, -inf
        %1590 = vmax.xlane.f32.xlu0 %v1589
        %v1591 = vpop.xlane.xlu0 %1590
        %v1592 = vsel %vm250, %v1504, -inf
        %1593 = vmax.xlane.f32.xlu0 %v1592
        %v1594 = vpop.xlane.xlu0 %1593
        %v1595 = vsel %vm250, %v1505, -inf
        %1596 = vmax.xlane.f32.xlu0 %v1595
        %v1597 = vpop.xlane.xlu0 %1596
        %v1598 = vsel %vm250, %v1506, -inf
        %1599 = vmax.xlane.f32.xlu0 %v1598
        %v1600 = vpop.xlane.xlu0 %1599
        %v1601 = vsel %vm250, %v1507, -inf
        %1602 = vmax.xlane.f32.xlu0 %v1601
        %v1603 = vpop.xlane.xlu0 %1602
        %v1604 = vsub.f32 %v1476, %v1510
        %v1605 = vsub.f32 %v1477, %v1513
        %v1606 = vsub.f32 %v1478, %v1516
        %v1607 = vsub.f32 %v1479, %v1519
        %v1608 = vsub.f32 %v1480, %v1522
        %v1609 = vsub.f32 %v1481, %v1525
        %v1610 = vsub.f32 %v1482, %v1528
        %v1611 = vsub.f32 %v1483, %v1531
        %v1612 = vsub.f32 %v1484, %v1534
        %v1613 = vsub.f32 %v1485, %v1537
        %v1614 = vsub.f32 %v1486, %v1540
        %v1615 = vsub.f32 %v1487, %v1543
        %v1616 = vsub.f32 %v1488, %v1546
        %v1617 = vsub.f32 %v1489, %v1549
        %v1618 = vsub.f32 %v1490, %v1552
        %v1619 = vsub.f32 %v1491, %v1555
        %v1620 = vsub.f32 %v1492, %v1558
        %v1621 = vsub.f32 %v1493, %v1561
        %v1622 = vsub.f32 %v1494, %v1564
        %v1623 = vsub.f32 %v1495, %v1567
        %v1624 = vsub.f32 %v1496, %v1570
        %v1625 = vsub.f32 %v1497, %v1573
        %v1626 = vsub.f32 %v1498, %v1576
        %v1627 = vsub.f32 %v1499, %v1579
        %v1628 = vsub.f32 %v1500, %v1582
        %v1629 = vsub.f32 %v1501, %v1585
        %v1630 = vsub.f32 %v1502, %v1588
        %v1631 = vsub.f32 %v1503, %v1591
        %v1632 = vsub.f32 %v1504, %v1594
        %v1633 = vsub.f32 %v1505, %v1597
        %v1634 = vsub.f32 %v1506, %v1600
        %v1635 = vsub.f32 %v1507, %v1603
        %v1636 = vmul.f32 %v1604, 1.442695
        %v1637 = vpow.pop %v1636
        %v1638 = vmul.f32 %v1605, 1.442695
        %v1639 = vpow.pop %v1638
        %v1640 = vmul.f32 %v1606, 1.442695
        %v1641 = vpow.pop %v1640
        %v1642 = vmul.f32 %v1607, 1.442695
        %v1643 = vpow.pop %v1642
        %v1644 = vmul.f32 %v1608, 1.442695
        %v1645 = vpow.pop %v1644
        %v1646 = vmul.f32 %v1609, 1.442695
        %v1647 = vpow.pop %v1646
        %v1648 = vmul.f32 %v1610, 1.442695
        %v1649 = vpow.pop %v1648
        %v1650 = vmul.f32 %v1611, 1.442695
        %v1651 = vpow.pop %v1650
        %v1652 = vmul.f32 %v1612, 1.442695
        %v1653 = vpow.pop %v1652
        %v1654 = vmul.f32 %v1613, 1.442695
        %v1655 = vpow.pop %v1654
        %v1656 = vmul.f32 %v1614, 1.442695
        %v1657 = vpow.pop %v1656
        %v1658 = vmul.f32 %v1615, 1.442695
        %v1659 = vpow.pop %v1658
        %v1660 = vmul.f32 %v1616, 1.442695
        %v1661 = vpow.pop %v1660
        %v1662 = vmul.f32 %v1617, 1.442695
        %v1663 = vpow.pop %v1662
        %v1664 = vmul.f32 %v1618, 1.442695
        %v1665 = vpow.pop %v1664
        %v1666 = vmul.f32 %v1619, 1.442695
        %v1667 = vpow.pop %v1666
        %v1668 = vmul.f32 %v1620, 1.442695
        %v1669 = vpow.pop %v1668
        %v1670 = vmul.f32 %v1621, 1.442695
        %v1671 = vpow.pop %v1670
        %v1672 = vmul.f32 %v1622, 1.442695
        %v1673 = vpow.pop %v1672
        %v1674 = vmul.f32 %v1623, 1.442695
        %v1675 = vpow.pop %v1674
        %v1676 = vmul.f32 %v1624, 1.442695
        %v1677 = vpow.pop %v1676
        %v1678 = vmul.f32 %v1625, 1.442695
        %v1679 = vpow.pop %v1678
        %v1680 = vmul.f32 %v1626, 1.442695
        %v1681 = vpow.pop %v1680
        %v1682 = vmul.f32 %v1627, 1.442695
        %v1683 = vpow.pop %v1682
        %v1684 = vmul.f32 %v1628, 1.442695
        %v1685 = vpow.pop %v1684
        %v1686 = vmul.f32 %v1629, 1.442695
        %v1687 = vpow.pop %v1686
        %v1688 = vmul.f32 %v1630, 1.442695
        %v1689 = vpow.pop %v1688
        %v1690 = vmul.f32 %v1631, 1.442695
        %v1691 = vpow.pop %v1690
        %v1692 = vmul.f32 %v1632, 1.442695
        %v1693 = vpow.pop %v1692
        %v1694 = vmul.f32 %v1633, 1.442695
        %v1695 = vpow.pop %v1694
        %v1696 = vmul.f32 %v1634, 1.442695
        %v1697 = vpow.pop %v1696
        %v1698 = vmul.f32 %v1635, 1.442695
        %v1699 = vpow.pop %v1698
        %v1700 = vsel %vm250, %v1637, 0.0
        %1701 = vadd.xlane.f32.xlu0 %v1700
        %v1702 = vpop.xlane.xlu0 %1701
        %v1703 = vsel %vm250, %v1639, 0.0
        %1704 = vadd.xlane.f32.xlu0 %v1703
        %v1705 = vpop.xlane.xlu0 %1704
        %v1706 = vsel %vm250, %v1641, 0.0
        %1707 = vadd.xlane.f32.xlu0 %v1706
        %v1708 = vpop.xlane.xlu0 %1707
        %v1709 = vsel %vm250, %v1643, 0.0
        %1710 = vadd.xlane.f32.xlu0 %v1709
        %v1711 = vpop.xlane.xlu0 %1710
        %v1712 = vsel %vm250, %v1645, 0.0
        %1713 = vadd.xlane.f32.xlu0 %v1712
        %v1714 = vpop.xlane.xlu0 %1713
        %v1715 = vsel %vm250, %v1647, 0.0
        %1716 = vadd.xlane.f32.xlu0 %v1715
        %v1717 = vpop.xlane.xlu0 %1716
        %v1718 = vsel %vm250, %v1649, 0.0
        %1719 = vadd.xlane.f32.xlu0 %v1718
        %v1720 = vpop.xlane.xlu0 %1719
        %v1721 = vsel %vm250, %v1651, 0.0
        %1722 = vadd.xlane.f32.xlu0 %v1721
        %v1723 = vpop.xlane.xlu0 %1722
        %v1724 = vsel %vm250, %v1653, 0.0
        %1725 = vadd.xlane.f32.xlu0 %v1724
        %v1726 = vpop.xlane.xlu0 %1725
        %v1727 = vsel %vm250, %v1655, 0.0
        %1728 = vadd.xlane.f32.xlu0 %v1727
        %v1729 = vpop.xlane.xlu0 %1728
        %v1730 = vsel %vm250, %v1657, 0.0
        %1731 = vadd.xlane.f32.xlu0 %v1730
        %v1732 = vpop.xlane.xlu0 %1731
        %v1733 = vsel %vm250, %v1659, 0.0
        %1734 = vadd.xlane.f32.xlu0 %v1733
        %v1735 = vpop.xlane.xlu0 %1734
        %v1736 = vsel %vm250, %v1661, 0.0
        %1737 = vadd.xlane.f32.xlu0 %v1736
        %v1738 = vpop.xlane.xlu0 %1737
        %v1739 = vsel %vm250, %v1663, 0.0
        %1740 = vadd.xlane.f32.xlu0 %v1739
        %v1741 = vpop.xlane.xlu0 %1740
        %v1742 = vsel %vm250, %v1665, 0.0
        %1743 = vadd.xlane.f32.xlu0 %v1742
        %v1744 = vpop.xlane.xlu0 %1743
        %v1745 = vsel %vm250, %v1667, 0.0
        %1746 = vadd.xlane.f32.xlu0 %v1745
        %v1747 = vpop.xlane.xlu0 %1746
        %v1748 = vsel %vm250, %v1669, 0.0
        %1749 = vadd.xlane.f32.xlu0 %v1748
        %v1750 = vpop.xlane.xlu0 %1749
        %v1751 = vsel %vm250, %v1671, 0.0
        %1752 = vadd.xlane.f32.xlu0 %v1751
        %v1753 = vpop.xlane.xlu0 %1752
        %v1754 = vsel %vm250, %v1673, 0.0
        %1755 = vadd.xlane.f32.xlu0 %v1754
        %v1756 = vpop.xlane.xlu0 %1755
        %v1757 = vsel %vm250, %v1675, 0.0
        %1758 = vadd.xlane.f32.xlu0 %v1757
        %v1759 = vpop.xlane.xlu0 %1758
        %v1760 = vsel %vm250, %v1677, 0.0
        %1761 = vadd.xlane.f32.xlu0 %v1760
        %v1762 = vpop.xlane.xlu0 %1761
        %v1763 = vsel %vm250, %v1679, 0.0
        %1764 = vadd.xlane.f32.xlu0 %v1763
        %v1765 = vpop.xlane.xlu0 %1764
        %v1766 = vsel %vm250, %v1681, 0.0
        %1767 = vadd.xlane.f32.xlu0 %v1766
        %v1768 = vpop.xlane.xlu0 %1767
        %v1769 = vsel %vm250, %v1683, 0.0
        %1770 = vadd.xlane.f32.xlu0 %v1769
        %v1771 = vpop.xlane.xlu0 %1770
        %v1772 = vsel %vm250, %v1685, 0.0
        %1773 = vadd.xlane.f32.xlu0 %v1772
        %v1774 = vpop.xlane.xlu0 %1773
        %v1775 = vsel %vm250, %v1687, 0.0
        %1776 = vadd.xlane.f32.xlu0 %v1775
        %v1777 = vpop.xlane.xlu0 %1776
        %v1778 = vsel %vm250, %v1689, 0.0
        %1779 = vadd.xlane.f32.xlu0 %v1778
        %v1780 = vpop.xlane.xlu0 %1779
        %v1781 = vsel %vm250, %v1691, 0.0
        %1782 = vadd.xlane.f32.xlu0 %v1781
        %v1783 = vpop.xlane.xlu0 %1782
        %v1784 = vsel %vm250, %v1693, 0.0
        %1785 = vadd.xlane.f32.xlu0 %v1784
        %v1786 = vpop.xlane.xlu0 %1785
        %v1787 = vsel %vm250, %v1695, 0.0
        %1788 = vadd.xlane.f32.xlu0 %v1787
        %v1789 = vpop.xlane.xlu0 %1788
        %v1790 = vsel %vm250, %v1697, 0.0
        %1791 = vadd.xlane.f32.xlu0 %v1790
        %v1792 = vpop.xlane.xlu0 %1791
        %v1793 = vsel %vm250, %v1699, 0.0
        %1794 = vadd.xlane.f32.xlu0 %v1793
        %v1795 = vpop.xlane.xlu0 %1794
        %v1796 = vrcp.pop %v1702
        %v1797 = vrcp.pop %v1705
        %v1798 = vrcp.pop %v1708
        %v1799 = vrcp.pop %v1711
        %v1800 = vrcp.pop %v1714
        %v1801 = vrcp.pop %v1717
        %v1802 = vrcp.pop %v1720
        %v1803 = vrcp.pop %v1723
        %v1804 = vrcp.pop %v1726
        %v1805 = vrcp.pop %v1729
        %v1806 = vrcp.pop %v1732
        %v1807 = vrcp.pop %v1735
        %v1808 = vrcp.pop %v1738
        %v1809 = vrcp.pop %v1741
        %v1810 = vrcp.pop %v1744
        %v1811 = vrcp.pop %v1747
        %v1812 = vrcp.pop %v1750
        %v1813 = vrcp.pop %v1753
        %v1814 = vrcp.pop %v1756
        %v1815 = vrcp.pop %v1759
        %v1816 = vrcp.pop %v1762
        %v1817 = vrcp.pop %v1765
        %v1818 = vrcp.pop %v1768
        %v1819 = vrcp.pop %v1771
        %v1820 = vrcp.pop %v1774
        %v1821 = vrcp.pop %v1777
        %v1822 = vrcp.pop %v1780
        %v1823 = vrcp.pop %v1783
        %v1824 = vrcp.pop %v1786
        %v1825 = vrcp.pop %v1789
        %v1826 = vrcp.pop %v1792
        %v1827 = vrcp.pop %v1795
        %v1828 = vmul.f32 %v1637, %v1796
        %v1829 = vmul.f32 %v1639, %v1797
        %v1830 = vmul.f32 %v1641, %v1798
        %v1831 = vmul.f32 %v1643, %v1799
        %v1832 = vmul.f32 %v1645, %v1800
        %v1833 = vmul.f32 %v1647, %v1801
        %v1834 = vmul.f32 %v1649, %v1802
        %v1835 = vmul.f32 %v1651, %v1803
        %v1836 = vmul.f32 %v1653, %v1804
        %v1837 = vmul.f32 %v1655, %v1805
        %v1838 = vmul.f32 %v1657, %v1806
        %v1839 = vmul.f32 %v1659, %v1807
        %v1840 = vmul.f32 %v1661, %v1808
        %v1841 = vmul.f32 %v1663, %v1809
        %v1842 = vmul.f32 %v1665, %v1810
        %v1843 = vmul.f32 %v1667, %v1811
        %v1844 = vmul.f32 %v1669, %v1812
        %v1845 = vmul.f32 %v1671, %v1813
        %v1846 = vmul.f32 %v1673, %v1814
        %v1847 = vmul.f32 %v1675, %v1815
        %v1848 = vmul.f32 %v1677, %v1816
        %v1849 = vmul.f32 %v1679, %v1817
        %v1850 = vmul.f32 %v1681, %v1818
        %v1851 = vmul.f32 %v1683, %v1819
        %v1852 = vmul.f32 %v1685, %v1820
        %v1853 = vmul.f32 %v1687, %v1821
        %v1854 = vmul.f32 %v1689, %v1822
        %v1855 = vmul.f32 %v1691, %v1823
        %v1856 = vmul.f32 %v1693, %v1824
        %v1857 = vmul.f32 %v1695, %v1825
        %v1858 = vmul.f32 %v1697, %v1826
        %v1859 = vmul.f32 %v1699, %v1827
        %1860 = vrot.lane.b32.xlu0 %v414, 64
        %v1861 = vpop.permute.xlu0 %1860
        %1862 = vrot.lane.b32.xlu0 %v419, 64
        %v1863 = vpop.permute.xlu0 %1862
        %1864 = vrot.lane.b32.xlu0 %v424, 64
        %v1865 = vpop.permute.xlu0 %1864
        %1866 = vrot.lane.b32.xlu0 %v429, 64
        %v1867 = vpop.permute.xlu0 %1866
        %1868 = vrot.lane.b32.xlu0 %v434, 64
        %v1869 = vpop.permute.xlu0 %1868
        %1870 = vrot.lane.b32.xlu0 %v439, 64
        %v1871 = vpop.permute.xlu0 %1870
        %1872 = vrot.lane.b32.xlu0 %v444, 64
        %v1873 = vpop.permute.xlu0 %1872
        %1874 = vrot.lane.b32.xlu0 %v449, 64
        %v1875 = vpop.permute.xlu0 %1874
        %1876 = vrot.lane.b32.xlu0 %v454, 64
        %v1877 = vpop.permute.xlu0 %1876
        %1878 = vrot.lane.b32.xlu0 %v459, 64
        %v1879 = vpop.permute.xlu0 %1878
        %1880 = vrot.lane.b32.xlu0 %v464, 64
        %v1881 = vpop.permute.xlu0 %1880
        %1882 = vrot.lane.b32.xlu0 %v469, 64
        %v1883 = vpop.permute.xlu0 %1882
        %1884 = vrot.lane.b32.xlu0 %v474, 64
        %v1885 = vpop.permute.xlu0 %1884
        %1886 = vrot.lane.b32.xlu0 %v479, 64
        %v1887 = vpop.permute.xlu0 %1886
        %1888 = vrot.lane.b32.xlu0 %v484, 64
        %v1889 = vpop.permute.xlu0 %1888
        %1890 = vrot.lane.b32.xlu0 %v489, 64
        %v1891 = vpop.permute.xlu0 %1890
        %1892 = vrot.lane.b32.xlu0 %v494, 64
        %v1893 = vpop.permute.xlu0 %1892
        %1894 = vrot.lane.b32.xlu0 %v499, 64
        %v1895 = vpop.permute.xlu0 %1894
        %1896 = vrot.lane.b32.xlu0 %v504, 64
        %v1897 = vpop.permute.xlu0 %1896
        %1898 = vrot.lane.b32.xlu0 %v509, 64
        %v1899 = vpop.permute.xlu0 %1898
        %1900 = vrot.lane.b32.xlu0 %v514, 64
        %v1901 = vpop.permute.xlu0 %1900
        %1902 = vrot.lane.b32.xlu0 %v519, 64
        %v1903 = vpop.permute.xlu0 %1902
        %1904 = vrot.lane.b32.xlu0 %v524, 64
        %v1905 = vpop.permute.xlu0 %1904
        %1906 = vrot.lane.b32.xlu0 %v529, 64
        %v1907 = vpop.permute.xlu0 %1906
        %1908 = vrot.lane.b32.xlu0 %v534, 64
        %v1909 = vpop.permute.xlu0 %1908
        %1910 = vrot.lane.b32.xlu0 %v539, 64
        %v1911 = vpop.permute.xlu0 %1910
        %1912 = vrot.lane.b32.xlu0 %v544, 64
        %v1913 = vpop.permute.xlu0 %1912
        %1914 = vrot.lane.b32.xlu0 %v549, 64
        %v1915 = vpop.permute.xlu0 %1914
        %1916 = vrot.lane.b32.xlu0 %v554, 64
        %v1917 = vpop.permute.xlu0 %1916
        %1918 = vrot.lane.b32.xlu0 %v559, 64
        %v1919 = vpop.permute.xlu0 %1918
        %1920 = vrot.lane.b32.xlu0 %v564, 64
        %v1921 = vpop.permute.xlu0 %1920
        %1922 = vrot.lane.b32.xlu0 %v569, 64
        %v1923 = vpop.permute.xlu0 %1922
        %v1956 = vmul.f32 %v1828, %v1861
        %v1957 = vmul.f32 %v1829, %v1863
        %v1958 = vmul.f32 %v1830, %v1865
        %v1959 = vmul.f32 %v1831, %v1867
        %v1960 = vmul.f32 %v1832, %v1869
        %v1961 = vmul.f32 %v1833, %v1871
        %v1962 = vmul.f32 %v1834, %v1873
        %v1963 = vmul.f32 %v1835, %v1875
        %v1964 = vmul.f32 %v1836, %v1877
        %v1965 = vmul.f32 %v1837, %v1879
        %v1966 = vmul.f32 %v1838, %v1881
        %v1967 = vmul.f32 %v1839, %v1883
        %v1968 = vmul.f32 %v1840, %v1885
        %v1969 = vmul.f32 %v1841, %v1887
        %v1970 = vmul.f32 %v1842, %v1889
        %v1971 = vmul.f32 %v1843, %v1891
        %v1972 = vmul.f32 %v1844, %v1893
        %v1973 = vmul.f32 %v1845, %v1895
        %v1974 = vmul.f32 %v1846, %v1897
        %v1975 = vmul.f32 %v1847, %v1899
        %v1976 = vmul.f32 %v1848, %v1901
        %v1977 = vmul.f32 %v1849, %v1903
        %v1978 = vmul.f32 %v1850, %v1905
        %v1979 = vmul.f32 %v1851, %v1907
        %v1980 = vmul.f32 %v1852, %v1909
        %v1981 = vmul.f32 %v1853, %v1911
        %v1982 = vmul.f32 %v1854, %v1913
        %v1983 = vmul.f32 %v1855, %v1915
        %v1984 = vmul.f32 %v1856, %v1917
        %v1985 = vmul.f32 %v1857, %v1919
        %v1986 = vmul.f32 %v1858, %v1921
        %v1987 = vmul.f32 %v1859, %v1923
        %1988 = vst.msk [vmem:[%s204] sm:$0xff] %vm250, %v1956
        %1989 = vst.msk [vmem:[%s204 + $0x8] sm:$0xff] %vm250, %v1957
        %1990 = vst.msk [vmem:[%s204 + $0x10] sm:$0xff] %vm250, %v1958
        %1991 = vst.msk [vmem:[%s204 + $0x18] sm:$0xff] %vm250, %v1959
        %1992 = vst.msk [vmem:[%s204 + $0x20] sm:$0xff] %vm250, %v1960
        %1993 = vst.msk [vmem:[%s204 + $0x28] sm:$0xff] %vm250, %v1961
        %1994 = vst.msk [vmem:[%s204 + $0x30] sm:$0xff] %vm250, %v1962
        %1995 = vst.msk [vmem:[%s204 + $0x38] sm:$0xff] %vm250, %v1963
        %1996 = vst.msk [vmem:[%s204 + $0x40] sm:$0xff] %vm250, %v1964
        %1997 = vst.msk [vmem:[%s204 + $0x48] sm:$0xff] %vm250, %v1965
        %1998 = vst.msk [vmem:[%s204 + $0x50] sm:$0xff] %vm250, %v1966
        %1999 = vst.msk [vmem:[%s204 + $0x58] sm:$0xff] %vm250, %v1967
        %2000 = vst.msk [vmem:[%s204 + $0x60] sm:$0xff] %vm250, %v1968
        %2001 = vst.msk [vmem:[%s204 + $0x68] sm:$0xff] %vm250, %v1969
        %2002 = vst.msk [vmem:[%s204 + $0x70] sm:$0xff] %vm250, %v1970
        %2003 = vst.msk [vmem:[%s204 + $0x78] sm:$0xff] %vm250, %v1971
        %2004 = vst.msk [vmem:[%s204 + $0x80] sm:$0xff] %vm250, %v1972
        %2005 = vst.msk [vmem:[%s204 + $0x88] sm:$0xff] %vm250, %v1973
        %2006 = vst.msk [vmem:[%s204 + $0x90] sm:$0xff] %vm250, %v1974
        %2007 = vst.msk [vmem:[%s204 + $0x98] sm:$0xff] %vm250, %v1975
        %2008 = vst.msk [vmem:[%s204 + $0xa0] sm:$0xff] %vm250, %v1976
        %2009 = vst.msk [vmem:[%s204 + $0xa8] sm:$0xff] %vm250, %v1977
        %2010 = vst.msk [vmem:[%s204 + $0xb0] sm:$0xff] %vm250, %v1978
        %2011 = vst.msk [vmem:[%s204 + $0xb8] sm:$0xff] %vm250, %v1979
        %2012 = vst.msk [vmem:[%s204 + $0xc0] sm:$0xff] %vm250, %v1980
        %2013 = vst.msk [vmem:[%s204 + $0xc8] sm:$0xff] %vm250, %v1981
        %2014 = vst.msk [vmem:[%s204 + $0xd0] sm:$0xff] %vm250, %v1982
        %2015 = vst.msk [vmem:[%s204 + $0xd8] sm:$0xff] %vm250, %v1983
        %2016 = vst.msk [vmem:[%s204 + $0xe0] sm:$0xff] %vm250, %v1984
        %2017 = vst.msk [vmem:[%s204 + $0xe8] sm:$0xff] %vm250, %v1985
        %2018 = vst.msk [vmem:[%s204 + $0xf0] sm:$0xff] %vm250, %v1986
        %2019 = vst.msk [vmem:[%s204 + $0xf8] sm:$0xff] %vm250, %v1987
        %s2020 = sand.u32 %s97, 1
        %s2021 = scalar_lea.sflag [#allocation4], %s2020
        %s2022 = sand.u32 %s97, 1
        %s2023 = smul.addr %s2022, 256
        %s2024 = scalar_lea.vmem [#allocation7], %s2023
        // Predicated region
        $region41: #{tpu_custom_call.1} parent=31 // pred_check
          %p2025 = pneg %p107
        $region42: #{tpu_custom_call.1} parent=31 // pred_check_branch
          %2027 = sbr.rel (%p2025) target = $region44
        $region43: #{tpu_custom_call.1} parent=31 // pred_region
          %s2028 = smul.u32 8, %s21
          %s2030 = ssub.s32 4096, 4096
          %2031 = vsyncadd %s2021, %s2030
          %s2032 = smul.addr %s2028, 4
          %s2033 = smul.addr %s2032, 128
          %s2034 = scalar_lea.hbm %s3, %s2033
          %s2035 = sshll.u32 %s2024, 4
          %s2036 = int_to_ptr.vmem [resolvable:$true] %s2035
          %2041 = dma.vmem_to_hbm [thread:$0]  %s2036, 4096, %s2034, %s2021, 128, 128, 8
        $region44: #{tpu_custom_call.1} parent=31 // pred_fallthru
          _
      $region32: #{tpu_custom_call.1} parent=5 // pred_fallthru
        _
      %p2042 = scmp.le.s32.totalorder 2, %s16
      // Predicated region
      $region45: #{tpu_custom_call.1} parent=5 // pred_check
        %p2043 = pneg %p2042
      $region46: #{tpu_custom_call.1} parent=5 // pred_check_branch
        %2045 = sbr.rel (%p2043) target = $region48
      $region47: #{tpu_custom_call.1} parent=5 // pred_region
        %s2046 = ssub.s32 %s16, 2
        // Predicated region
        $region49: #{tpu_custom_call.1} parent=47 // pred_check
          %p2047 = pneg %p113
        $region50: #{tpu_custom_call.1} parent=47 // pred_check_branch
          %2049 = sbr.rel (%p2047) target = $region52
        $region51: #{tpu_custom_call.1} parent=47 // pred_region
          %s2050 = sand.u32 %s98, 1
          %s2051 = scalar_lea.sflag [#allocation4], %s2050
          %s2052 = sand.u32 %s98, 1
          %s2053 = smul.addr %s2052, 256
          %s2054 = scalar_lea.vmem [#allocation7], %s2053
          %2055 = dma.done %s2051, 4096
        $region52: #{tpu_custom_call.1} parent=47 // pred_fallthru
          _
      $region48: #{tpu_custom_call.1} parent=5 // pred_fallthru
        _
    $region6: #{tpu_custom_call.1} parent=1 // loop_footer
      %s20 = sadd.s32 1, %s16
    $region7: #{tpu_custom_call.1} parent=1 // loop_footer_branch
      %15 = sbr.rel target = $region3
    $region8: #{tpu_custom_call.1} parent=1 // loop_exit
      _
    %2056 = vsyncpa [#allocation3], 1
    %s2057 = scalar_lea.sflag [#allocation3], 1
    %2058 = vsyncpa %s2057, 1
    %2059 = vsyncpa [#allocation6], 1
    %2060 = vsyncpa [#allocation4], 1
    %s2061 = scalar_lea.sflag [#allocation4], 1
    %2062 = vsyncpa %s2061, 1

</llo_original>
